<compile_context>
chip_gen: v7x
topology: tpu7x:2x2x1
jax: 0.10.0
libtpu: 0.0.40
codegen_flags: <defaults>
</compile_context>

<pallas_src>
import jax
import jax.numpy as jnp
from jax.experimental import pallas as pl
from jax.experimental.pallas import tpu as pltpu

IN_FEATURES = 1024
OUT_FEATURES = 768


def _dense_tanh(x_ref, w_ref, b_ref):
    # MXU matmul in the weight dtype (bf16 preferred), f32 accumulation.
    y = jnp.dot(x_ref[...].astype(w_ref.dtype), w_ref[...],
                preferred_element_type=jnp.float32)
    y = y + b_ref[...]          # bias broadcast over rows (f32)
    return jnp.tanh(y)          # EUP tanh in f32


def _eval_kernel(x_ref, w_ref, b_ref, o_ref):
    o_ref[...] = _dense_tanh(x_ref, w_ref, b_ref).astype(o_ref.dtype)


def _train_kernel(x_ref, w_ref, b_ref, m_ref, o_ref):
    # m_ref holds the pre-scaled inverted-dropout mask (0.0 or 1/(1-p)).
    y = _dense_tanh(x_ref, w_ref, b_ref) * m_ref[...]
    o_ref[...] = y.astype(o_ref.dtype)


def generator_forward(x, w, b, *, p=0.5, training=False, rng=None,
                      tb=None, tn=None):
    """Fused Linear(1024->768) + Tanh + Dropout(p).

    x: (B, 1024) float, w: (1024, 768) (transposed vs. PyTorch; bf16
    recommended), b: (768,) float.
    """
    B, K = x.shape
    Kw, N = w.shape
    assert K == IN_FEATURES and Kw == IN_FEATURES and N == OUT_FEATURES

    # Default tiling: whole batch (up to 128 rows per tile) x full 768 lanes.
    if tb is None:
        tb = B if B <= 128 else 128
    if tn is None:
        tn = N
    assert B % tb == 0 and N % tn == 0

    b2 = b.reshape(1, N).astype(jnp.float32)
    grid = (B // tb, N // tn)

    in_specs = [
        pl.BlockSpec((tb, K), lambda i, j: (i, 0)),   # x batch tile
        pl.BlockSpec((K, tn), lambda i, j: (0, j)),   # weight column tile (resident)
        pl.BlockSpec((1, tn), lambda i, j: (0, j)),   # bias tile
    ]
    out_spec = pl.BlockSpec((tb, tn), lambda i, j: (i, j))

    bytes_accessed = (x.nbytes + w.nbytes + b2.nbytes
                      + B * N * x.dtype.itemsize)
    args = [x, w, b2]

    if training:
        # TODO(synk): on real TPU hardware the mask could be drawn in-kernel
        # with pltpu.prng_seed / pltpu.prng_random_bits (bitcast to uint32
        # before the threshold compare); that primitive does not lower in
        # interpret mode, so the Bernoulli mask is drawn with jax.random here
        # and fused into the kernel as a single multiply.
        assert rng is not None, "training=True requires an rng key"
        keep = jax.random.bernoulli(rng, 1.0 - p, (B, N))
        mask = keep.astype(jnp.float32) * (1.0 / (1.0 - p))
        in_specs.append(pl.BlockSpec((tb, tn), lambda i, j: (i, j)))
        args.append(mask)
        bytes_accessed += mask.nbytes
        kernel = _train_kernel
    else:
        kernel = _eval_kernel

    cost = pl.CostEstimate(flops=2 * B * K * N,
                           transcendentals=B * N,
                           bytes_accessed=bytes_accessed)

    return pl.pallas_call(
        kernel,
        out_shape=jax.ShapeDtypeStruct((B, N), x.dtype),
        grid=grid,
        in_specs=in_specs,
        out_specs=out_spec,
        cost_estimate=cost,
        compiler_params=pltpu.CompilerParams(
            dimension_semantics=("parallel", "parallel")),
    )(*args)


if __name__ == "__main__":
    key = jax.random.PRNGKey(0)
    kx, kw, kb, kd = jax.random.split(key, 4)

    B = 8  # small batch; feature dims are fixed by the module (1024 -> 768)
    x = jax.random.normal(kx, (B, IN_FEATURES), dtype=jnp.float32)

    # Deterministic PyTorch-style init: U(-1/sqrt(fan_in), 1/sqrt(fan_in))
    bound = 1.0 / (IN_FEATURES ** 0.5)
    w_f32 = jax.random.uniform(kw, (IN_FEATURES, OUT_FEATURES),
                               minval=-bound, maxval=bound, dtype=jnp.float32)
    b = jax.random.uniform(kb, (OUT_FEATURES,),
                           minval=-bound, maxval=bound, dtype=jnp.float32)
    # bf16 weights: halves the weight DMA; matmul still accumulates in f32.
    w = w_f32.astype(jnp.bfloat16)

    # Eval-mode forward (dropout = identity): check against pure-JAX reference
    # computed with the same bf16 weights / f32 accumulation.
    out_eval = jax.block_until_ready(generator_forward(x, w, b, training=False))
    ref = jnp.tanh(jnp.dot(x.astype(jnp.bfloat16), w,
                           preferred_element_type=jnp.float32) + b[None, :])
    assert out_eval.shape == (B, OUT_FEATURES)
    assert jnp.allclose(out_eval, ref, atol=2e-3, rtol=2e-3), "eval mismatch"

    # Training-mode forward: inverted dropout with p = 0.5.
    out_train = jax.block_until_ready(
        generator_forward(x, w, b, training=True, rng=kd))
    assert out_train.shape == (B, OUT_FEATURES)
    dropped_frac = float(jnp.mean(out_train == 0.0))
    assert 0.2 < dropped_frac < 0.8, "dropout drop rate looks wrong"
    # Kept entries must equal exactly 2x the eval output (scale 1/(1-p) = 2).
    recon = jnp.where(out_train != 0.0, out_train, 2.0 * out_eval)
    assert jnp.allclose(recon, 2.0 * out_eval, atol=4e-3, rtol=4e-3), \
        "kept dropout entries should be 2x the eval output"

    print("KERNEL_OK")
</pallas_src>

<mosaic_0001>
module attributes {stable_mosaic.version = 11 : i64} {
  func.func @_eval_kernel(%arg0: i32, %arg1: i32, %arg2: memref<8x1024xf32, #tpu.memory_space<vmem>>, %arg3: memref<1024x768xbf16, #tpu.memory_space<vmem>>, %arg4: memref<1x768xf32, #tpu.memory_space<vmem>>, %arg5: memref<8x768xf32, #tpu.memory_space<vmem>>) attributes {dimension_semantics = [#tpu.dimension_semantics<parallel>, #tpu.dimension_semantics<parallel>], iteration_bounds = array<i64: 1, 1>, scalar_prefetch = 0 : i64, scratch_operands = 0 : i64, tpu.core_type = #tpu.core_type<tc>, window_params = [{transform_indices = @transform_0, window_bounds = array<i64: 8, 1024>}, {transform_indices = @transform_1, window_bounds = array<i64: 1024, 768>}, {transform_indices = @transform_2, window_bounds = array<i64: 1, 768>}, {transform_indices = @transform_3, window_bounds = array<i64: 8, 768>}]} {
    %c0 = arith.constant 0 : index
    %c0_0 = arith.constant 0 : index
    %0 = vector.load %arg2[%c0, %c0_0] : memref<8x1024xf32, #tpu.memory_space<vmem>>, vector<8x1024xf32>
    %1 = arith.truncf %0 : vector<8x1024xf32> to vector<8x1024xbf16>
    %c0_1 = arith.constant 0 : index
    %c0_2 = arith.constant 0 : index
    %2 = vector.load %arg3[%c0_1, %c0_2] : memref<1024x768xbf16, #tpu.memory_space<vmem>>, vector<1024x768xbf16>
    %cst = arith.constant dense<0.000000e+00> : vector<8x768xf32>
    %3 = tpu.matmul %1, %2, %cst {dimension_numbers = #tpu.dot_dimension_numbers<[1], [0], [0], [1], [0, 0, 1, 1], [], []>} : vector<8x1024xbf16>, vector<1024x768xbf16>, vector<8x768xf32> -> vector<8x768xf32>
    %c0_3 = arith.constant 0 : index
    %c0_4 = arith.constant 0 : index
    %4 = vector.load %arg4[%c0_3, %c0_4] : memref<1x768xf32, #tpu.memory_space<vmem>>, vector<1x768xf32>
    %5 = vector.broadcast %4 : vector<1x768xf32> to vector<8x768xf32>
    %6 = arith.addf %3, %5 : vector<8x768xf32>
    %7 = math.tanh %6 : vector<8x768xf32>
    %c0_5 = arith.constant 0 : index
    %c0_6 = arith.constant 0 : index
    %8 = vector.load %arg5[%c0_5, %c0_6] : memref<8x768xf32, #tpu.memory_space<vmem>>, vector<8x768xf32>
    tpu.vector_store %arg5[%c0_5, %c0_6], %7 {strides = array<i32>} : memref<8x768xf32, #tpu.memory_space<vmem>>, vector<8x768xf32>,
    return
  }
  func.func @transform_0(%arg0: i32, %arg1: i32) -> (i32, i32) {
    %c0_i32 = arith.constant 0 : i32
    %c0_i32_0 = arith.constant 0 : i32
    return %arg0, %c0_i32 : i32, i32
  }
  func.func @transform_1(%arg0: i32, %arg1: i32) -> (i32, i32) {
    %c0_i32 = arith.constant 0 : i32
    %c0_i32_0 = arith.constant 0 : i32
    return %c0_i32, %arg1 : i32, i32
  }
  func.func @transform_2(%arg0: i32, %arg1: i32) -> (i32, i32) {
    %c0_i32 = arith.constant 0 : i32
    %c0_i32_0 = arith.constant 0 : i32
    return %c0_i32, %arg1 : i32, i32
  }
  func.func @transform_3(%arg0: i32, %arg1: i32) -> (i32, i32) {
    %c0_i32 = arith.constant 0 : i32
    return %arg0, %arg1 : i32, i32
  }
}

</mosaic_0001>

<llo_original>
// kernel: tpu_custom_call.1
$region0: #{tpu_custom_call.1}
  #allocation0 [shape = 'u32[]', space=smem, size = 0x4, offset = 0x4, fixed_abs, tag = 'smem constant byte address 0x4 - core index']
  #allocation1 [shape = 'u32[144,128]{1,0:T(1,128)}', space=vmem, size = 0x12000, scoped, tag = 'internal scratch']
  %s0 = inlined_call_operand.hbm [shape: f32[8,1024], index: 0, kind: input, shape index: {}]
  %s1 = inlined_call_operand.hbm [shape: bf16[1024,768], index: 1, kind: input, shape index: {}]
  %s2 = inlined_call_operand.hbm [shape: f32[1,768], index: 2, kind: input, shape index: {}]
  %s3 = inlined_call_operand.hbm [shape: f32[8,768], index: 3, kind: output, shape index: {}]
  %s4 = sld [smem:[#allocation0]]
  $region34: #{tpu_custom_call.1} parent=0
    _
  %s6 = ssub.s32 1, %s4
  %s7 = scalar_select 0, %s6, %s4
  $region1: #{tpu_custom_call.1} parent=0
    #allocation2 [shape = 'u8[32768]{0}', space=vmem, size = 0x8000, scoped, tag = 'input window, operand 0, single buffered']
    #allocation3 [shape = 's32[1]{0}', space=sflag, size = 0x4, scoped, tag = 'scoped memory for tpu_custom_call.1']
    #allocation4 [shape = 's32[1]{0}', space=sflag, size = 0x4, scoped, tag = 'scoped memory for tpu_custom_call.1']
    #allocation5 [shape = 'u8[1572864]{0}', space=vmem, size = 0x180000, scoped, tag = 'input window, operand 1, single buffered']
    #allocation6 [shape = 's32[1]{0}', space=sflag, size = 0x4, scoped, tag = 'scoped memory for tpu_custom_call.1']
    #allocation7 [shape = 'u8[3072]{0}', space=vmem, size = 0xc00, scoped, tag = 'input window, operand 2, single buffered']
    #allocation8 [shape = 'u8[24576]{0}', space=vmem, size = 0x6000, scoped, tag = 'output window, operand 0, single buffered']
    %8 = vsyncpa [#allocation3], 0
    %9 = vsyncpa [#allocation6], 0
    %10 = vsyncpa [#allocation4], 0
    // Predicated region
    $region2: #{tpu_custom_call.1} parent=1 // pred_check
      _
    $region3: #{tpu_custom_call.1} parent=1 // pred_check_branch
      %12 = sbr.rel (0) target = $region5
    $region4: #{tpu_custom_call.1} parent=1 // pred_region
      %s14 = ssub.s32 1024, 1024
      %15 = vsyncadd [#allocation3], %s14
      %s17 = sshll.u32 [#allocation2], 4
      %s18 = int_to_ptr.vmem [resolvable:$true] %s17
      %20 = dma.hbm_to_vmem [thread:$0]  %s0, 1024, %s18, [#allocation3]
    $region5: #{tpu_custom_call.1} parent=1 // pred_fallthru
      _
    // Predicated region
    $region6: #{tpu_custom_call.1} parent=1 // pred_check
      _
    $region7: #{tpu_custom_call.1} parent=1 // pred_check_branch
      %22 = sbr.rel (0) target = $region9
    $region8: #{tpu_custom_call.1} parent=1 // pred_region
      %s24 = ssub.s32 49152, 49152
      %25 = vsyncadd [#allocation6], %s24
      %s26 = sshll.u32 [#allocation5], 4
      %s27 = int_to_ptr.vmem [resolvable:$true] %s26
      %32 = dma.hbm_to_vmem [thread:$0]  %s1, 49152, %s27, [#allocation6], 384, 384, 24
    $region9: #{tpu_custom_call.1} parent=1 // pred_fallthru
      _
    // Predicated region
    $region10: #{tpu_custom_call.1} parent=1 // pred_check
      _
    $region11: #{tpu_custom_call.1} parent=1 // pred_check_branch
      %34 = sbr.rel (0) target = $region13
    $region12: #{tpu_custom_call.1} parent=1 // pred_region
      %s36 = ssub.s32 96, 96
      %37 = vsyncadd [#allocation6], %s36
      %s39 = sshll.u32 [#allocation7], 4
      %s40 = int_to_ptr.vmem [resolvable:$true] %s39
      %42 = dma.hbm_to_vmem [thread:$0]  %s2, 96, %s40, [#allocation6]
    $region13: #{tpu_custom_call.1} parent=1 // pred_fallthru
      _
    // Predicated region
    $region14: #{tpu_custom_call.1} parent=1 // pred_check
      _
    $region15: #{tpu_custom_call.1} parent=1 // pred_check_branch
      %44 = sbr.rel (0) target = $region17
    $region16: #{tpu_custom_call.1} parent=1 // pred_region
      %45 = dma.done [#allocation3], 1024
    $region17: #{tpu_custom_call.1} parent=1 // pred_fallthru
      _
    // Predicated region
    $region18: #{tpu_custom_call.1} parent=1 // pred_check
      _
    $region19: #{tpu_custom_call.1} parent=1 // pred_check_branch
      %47 = sbr.rel (0) target = $region21
    $region20: #{tpu_custom_call.1} parent=1 // pred_region
      %48 = dma.done [#allocation6], 49152
    $region21: #{tpu_custom_call.1} parent=1 // pred_fallthru
      _
    // Predicated region
    $region22: #{tpu_custom_call.1} parent=1 // pred_check
      _
    $region23: #{tpu_custom_call.1} parent=1 // pred_check_branch
      %50 = sbr.rel (0) target = $region25
    $region24: #{tpu_custom_call.1} parent=1 // pred_region
      %51 = dma.done [#allocation6], 96
    $region25: #{tpu_custom_call.1} parent=1 // pred_fallthru
      _
    %v52 = vld [vmem:[#allocation2] sm:$0xff]
    %v53 = vld [vmem:[#allocation2 + $0x8] sm:$0xff]
    %v54 = vld [vmem:[#allocation2 + $0x10] sm:$0xff]
    %v55 = vld [vmem:[#allocation2 + $0x18] sm:$0xff]
    %v56 = vld [vmem:[#allocation2 + $0x20] sm:$0xff]
    %v57 = vld [vmem:[#allocation2 + $0x28] sm:$0xff]
    %v58 = vld [vmem:[#allocation2 + $0x30] sm:$0xff]
    %v59 = vld [vmem:[#allocation2 + $0x38] sm:$0xff]
    %v60 = vpack.c.bf16 %v52, %v52
    %v61 = vpack.c.bf16 %v53, %v53
    %v62 = vpack.c.bf16 %v54, %v54
    %v63 = vpack.c.bf16 %v55, %v55
    %v64 = vpack.c.bf16 %v56, %v56
    %v65 = vpack.c.bf16 %v57, %v57
    %v66 = vpack.c.bf16 %v58, %v58
    %v67 = vpack.c.bf16 %v59, %v59
    %v68 = vld [vmem:[#allocation5] sm:$0xff]
    %v69 = vld [vmem:[#allocation5 + $0x8] sm:$0xff]
    %v70 = vld [vmem:[#allocation5 + $0x10] sm:$0xff]
    %v71 = vld [vmem:[#allocation5 + $0x18] sm:$0xff]
    %v72 = vld [vmem:[#allocation5 + $0x20] sm:$0xff]
    %v73 = vld [vmem:[#allocation5 + $0x28] sm:$0xff]
    %v74 = vld [vmem:[#allocation5 + $0x30] sm:$0xff]
    %v75 = vld [vmem:[#allocation5 + $0x38] sm:$0xff]
    %v76 = vld [vmem:[#allocation5 + $0x40] sm:$0xff]
    %v77 = vld [vmem:[#allocation5 + $0x48] sm:$0xff]
    %v78 = vld [vmem:[#allocation5 + $0x50] sm:$0xff]
    %v79 = vld [vmem:[#allocation5 + $0x58] sm:$0xff]
    %v80 = vld [vmem:[#allocation5 + $0x60] sm:$0xff]
    %v81 = vld [vmem:[#allocation5 + $0x68] sm:$0xff]
    %v82 = vld [vmem:[#allocation5 + $0x70] sm:$0xff]
    %v83 = vld [vmem:[#allocation5 + $0x78] sm:$0xff]
    %v84 = vld [vmem:[#allocation5 + $0x80] sm:$0xff]
    %v85 = vld [vmem:[#allocation5 + $0x88] sm:$0xff]
    %v86 = vld [vmem:[#allocation5 + $0x90] sm:$0xff]
    %v87 = vld [vmem:[#allocation5 + $0x98] sm:$0xff]
    %v88 = vld [vmem:[#allocation5 + $0xa0] sm:$0xff]
    %v89 = vld [vmem:[#allocation5 + $0xa8] sm:$0xff]
    %v90 = vld [vmem:[#allocation5 + $0xb0] sm:$0xff]
    %v91 = vld [vmem:[#allocation5 + $0xb8] sm:$0xff]
    %v92 = vld [vmem:[#allocation5 + $0xc0] sm:$0xff]
    %v93 = vld [vmem:[#allocation5 + $0xc8] sm:$0xff]
    %v94 = vld [vmem:[#allocation5 + $0xd0] sm:$0xff]
    %v95 = vld [vmem:[#allocation5 + $0xd8] sm:$0xff]
    %v96 = vld [vmem:[#allocation5 + $0xe0] sm:$0xff]
    %v97 = vld [vmem:[#allocation5 + $0xe8] sm:$0xff]
    %v98 = vld [vmem:[#allocation5 + $0xf0] sm:$0xff]
    %v99 = vld [vmem:[#allocation5 + $0xf8] sm:$0xff]
    %v100 = vld [vmem:[#allocation5 + $0x100] sm:$0xff]
    %v101 = vld [vmem:[#allocation5 + $0x108] sm:$0xff]
    %v102 = vld [vmem:[#allocation5 + $0x110] sm:$0xff]
    %v103 = vld [vmem:[#allocation5 + $0x118] sm:$0xff]
    %v104 = vld [vmem:[#allocation5 + $0x120] sm:$0xff]
    %v105 = vld [vmem:[#allocation5 + $0x128] sm:$0xff]
    %v106 = vld [vmem:[#allocation5 + $0x130] sm:$0xff]
    %v107 = vld [vmem:[#allocation5 + $0x138] sm:$0xff]
    %v108 = vld [vmem:[#allocation5 + $0x140] sm:$0xff]
    %v109 = vld [vmem:[#allocation5 + $0x148] sm:$0xff]
    %v110 = vld [vmem:[#allocation5 + $0x150] sm:$0xff]
    %v111 = vld [vmem:[#allocation5 + $0x158] sm:$0xff]
    %v112 = vld [vmem:[#allocation5 + $0x160] sm:$0xff]
    %v113 = vld [vmem:[#allocation5 + $0x168] sm:$0xff]
    %v114 = vld [vmem:[#allocation5 + $0x170] sm:$0xff]
    %v115 = vld [vmem:[#allocation5 + $0x178] sm:$0xff]
    %v116 = vld [vmem:[#allocation5 + $0x180] sm:$0xff]
    %v117 = vld [vmem:[#allocation5 + $0x188] sm:$0xff]
    %v118 = vld [vmem:[#allocation5 + $0x190] sm:$0xff]
    %v119 = vld [vmem:[#allocation5 + $0x198] sm:$0xff]
    %v120 = vld [vmem:[#allocation5 + $0x1a0] sm:$0xff]
    %v121 = vld [vmem:[#allocation5 + $0x1a8] sm:$0xff]
    %v122 = vld [vmem:[#allocation5 + $0x1b0] sm:$0xff]
    %v123 = vld [vmem:[#allocation5 + $0x1b8] sm:$0xff]
    %v124 = vld [vmem:[#allocation5 + $0x1c0] sm:$0xff]
    %v125 = vld [vmem:[#allocation5 + $0x1c8] sm:$0xff]
    %v126 = vld [vmem:[#allocation5 + $0x1d0] sm:$0xff]
    %v127 = vld [vmem:[#allocation5 + $0x1d8] sm:$0xff]
    %v128 = vld [vmem:[#allocation5 + $0x1e0] sm:$0xff]
    %v129 = vld [vmem:[#allocation5 + $0x1e8] sm:$0xff]
    %v130 = vld [vmem:[#allocation5 + $0x1f0] sm:$0xff]
    %v131 = vld [vmem:[#allocation5 + $0x1f8] sm:$0xff]
    %v132 = vld [vmem:[#allocation5 + $0x200] sm:$0xff]
    %v133 = vld [vmem:[#allocation5 + $0x208] sm:$0xff]
    %v134 = vld [vmem:[#allocation5 + $0x210] sm:$0xff]
    %v135 = vld [vmem:[#allocation5 + $0x218] sm:$0xff]
    %v136 = vld [vmem:[#allocation5 + $0x220] sm:$0xff]
    %v137 = vld [vmem:[#allocation5 + $0x228] sm:$0xff]
    %v138 = vld [vmem:[#allocation5 + $0x230] sm:$0xff]
    %v139 = vld [vmem:[#allocation5 + $0x238] sm:$0xff]
    %v140 = vld [vmem:[#allocation5 + $0x240] sm:$0xff]
    %v141 = vld [vmem:[#allocation5 + $0x248] sm:$0xff]
    %v142 = vld [vmem:[#allocation5 + $0x250] sm:$0xff]
    %v143 = vld [vmem:[#allocation5 + $0x258] sm:$0xff]
    %v144 = vld [vmem:[#allocation5 + $0x260] sm:$0xff]
    %v145 = vld [vmem:[#allocation5 + $0x268] sm:$0xff]
    %v146 = vld [vmem:[#allocation5 + $0x270] sm:$0xff]
    %v147 = vld [vmem:[#allocation5 + $0x278] sm:$0xff]
    %v148 = vld [vmem:[#allocation5 + $0x280] sm:$0xff]
    %v149 = vld [vmem:[#allocation5 + $0x288] sm:$0xff]
    %v150 = vld [vmem:[#allocation5 + $0x290] sm:$0xff]
    %v151 = vld [vmem:[#allocation5 + $0x298] sm:$0xff]
    %v152 = vld [vmem:[#allocation5 + $0x2a0] sm:$0xff]
    %v153 = vld [vmem:[#allocation5 + $0x2a8] sm:$0xff]
    %v154 = vld [vmem:[#allocation5 + $0x2b0] sm:$0xff]
    %v155 = vld [vmem:[#allocation5 + $0x2b8] sm:$0xff]
    %v156 = vld [vmem:[#allocation5 + $0x2c0] sm:$0xff]
    %v157 = vld [vmem:[#allocation5 + $0x2c8] sm:$0xff]
    %v158 = vld [vmem:[#allocation5 + $0x2d0] sm:$0xff]
    %v159 = vld [vmem:[#allocation5 + $0x2d8] sm:$0xff]
    %v160 = vld [vmem:[#allocation5 + $0x2e0] sm:$0xff]
    %v161 = vld [vmem:[#allocation5 + $0x2e8] sm:$0xff]
    %v162 = vld [vmem:[#allocation5 + $0x2f0] sm:$0xff]
    %v163 = vld [vmem:[#allocation5 + $0x2f8] sm:$0xff]
    %v164 = vld [vmem:[#allocation5 + $0x300] sm:$0xff]
    %v165 = vld [vmem:[#allocation5 + $0x308] sm:$0xff]
    %v166 = vld [vmem:[#allocation5 + $0x310] sm:$0xff]
    %v167 = vld [vmem:[#allocation5 + $0x318] sm:$0xff]
    %v168 = vld [vmem:[#allocation5 + $0x320] sm:$0xff]
    %v169 = vld [vmem:[#allocation5 + $0x328] sm:$0xff]
    %v170 = vld [vmem:[#allocation5 + $0x330] sm:$0xff]
    %v171 = vld [vmem:[#allocation5 + $0x338] sm:$0xff]
    %v172 = vld [vmem:[#allocation5 + $0x340] sm:$0xff]
    %v173 = vld [vmem:[#allocation5 + $0x348] sm:$0xff]
    %v174 = vld [vmem:[#allocation5 + $0x350] sm:$0xff]
    %v175 = vld [vmem:[#allocation5 + $0x358] sm:$0xff]
    %v176 = vld [vmem:[#allocation5 + $0x360] sm:$0xff]
    %v177 = vld [vmem:[#allocation5 + $0x368] sm:$0xff]
    %v178 = vld [vmem:[#allocation5 + $0x370] sm:$0xff]
    %v179 = vld [vmem:[#allocation5 + $0x378] sm:$0xff]
    %v180 = vld [vmem:[#allocation5 + $0x380] sm:$0xff]
    %v181 = vld [vmem:[#allocation5 + $0x388] sm:$0xff]
    %v182 = vld [vmem:[#allocation5 + $0x390] sm:$0xff]
    %v183 = vld [vmem:[#allocation5 + $0x398] sm:$0xff]
    %v184 = vld [vmem:[#allocation5 + $0x3a0] sm:$0xff]
    %v185 = vld [vmem:[#allocation5 + $0x3a8] sm:$0xff]
    %v186 = vld [vmem:[#allocation5 + $0x3b0] sm:$0xff]
    %v187 = vld [vmem:[#allocation5 + $0x3b8] sm:$0xff]
    %v188 = vld [vmem:[#allocation5 + $0x3c0] sm:$0xff]
    %v189 = vld [vmem:[#allocation5 + $0x3c8] sm:$0xff]
    %v190 = vld [vmem:[#allocation5 + $0x3d0] sm:$0xff]
    %v191 = vld [vmem:[#allocation5 + $0x3d8] sm:$0xff]
    %v192 = vld [vmem:[#allocation5 + $0x3e0] sm:$0xff]
    %v193 = vld [vmem:[#allocation5 + $0x3e8] sm:$0xff]
    %v194 = vld [vmem:[#allocation5 + $0x3f0] sm:$0xff]
    %v195 = vld [vmem:[#allocation5 + $0x3f8] sm:$0xff]
    %v196 = vld [vmem:[#allocation5 + $0x400] sm:$0xff]
    %v197 = vld [vmem:[#allocation5 + $0x408] sm:$0xff]
    %v198 = vld [vmem:[#allocation5 + $0x410] sm:$0xff]
    %v199 = vld [vmem:[#allocation5 + $0x418] sm:$0xff]
    %v200 = vld [vmem:[#allocation5 + $0x420] sm:$0xff]
    %v201 = vld [vmem:[#allocation5 + $0x428] sm:$0xff]
    %v202 = vld [vmem:[#allocation5 + $0x430] sm:$0xff]
    %v203 = vld [vmem:[#allocation5 + $0x438] sm:$0xff]
    %v204 = vld [vmem:[#allocation5 + $0x440] sm:$0xff]
    %v205 = vld [vmem:[#allocation5 + $0x448] sm:$0xff]
    %v206 = vld [vmem:[#allocation5 + $0x450] sm:$0xff]
    %v207 = vld [vmem:[#allocation5 + $0x458] sm:$0xff]
    %v208 = vld [vmem:[#allocation5 + $0x460] sm:$0xff]
    %v209 = vld [vmem:[#allocation5 + $0x468] sm:$0xff]
    %v210 = vld [vmem:[#allocation5 + $0x470] sm:$0xff]
    %v211 = vld [vmem:[#allocation5 + $0x478] sm:$0xff]
    %v212 = vld [vmem:[#allocation5 + $0x480] sm:$0xff]
    %v213 = vld [vmem:[#allocation5 + $0x488] sm:$0xff]
    %v214 = vld [vmem:[#allocation5 + $0x490] sm:$0xff]
    %v215 = vld [vmem:[#allocation5 + $0x498] sm:$0xff]
    %v216 = vld [vmem:[#allocation5 + $0x4a0] sm:$0xff]
    %v217 = vld [vmem:[#allocation5 + $0x4a8] sm:$0xff]
    %v218 = vld [vmem:[#allocation5 + $0x4b0] sm:$0xff]
    %v219 = vld [vmem:[#allocation5 + $0x4b8] sm:$0xff]
    %v220 = vld [vmem:[#allocation5 + $0x4c0] sm:$0xff]
    %v221 = vld [vmem:[#allocation5 + $0x4c8] sm:$0xff]
    %v222 = vld [vmem:[#allocation5 + $0x4d0] sm:$0xff]
    %v223 = vld [vmem:[#allocation5 + $0x4d8] sm:$0xff]
    %v224 = vld [vmem:[#allocation5 + $0x4e0] sm:$0xff]
    %v225 = vld [vmem:[#allocation5 + $0x4e8] sm:$0xff]
    %v226 = vld [vmem:[#allocation5 + $0x4f0] sm:$0xff]
    %v227 = vld [vmem:[#allocation5 + $0x4f8] sm:$0xff]
    %v228 = vld [vmem:[#allocation5 + $0x500] sm:$0xff]
    %v229 = vld [vmem:[#allocation5 + $0x508] sm:$0xff]
    %v230 = vld [vmem:[#allocation5 + $0x510] sm:$0xff]
    %v231 = vld [vmem:[#allocation5 + $0x518] sm:$0xff]
    %v232 = vld [vmem:[#allocation5 + $0x520] sm:$0xff]
    %v233 = vld [vmem:[#allocation5 + $0x528] sm:$0xff]
    %v234 = vld [vmem:[#allocation5 + $0x530] sm:$0xff]
    %v235 = vld [vmem:[#allocation5 + $0x538] sm:$0xff]
    %v236 = vld [vmem:[#allocation5 + $0x540] sm:$0xff]
    %v237 = vld [vmem:[#allocation5 + $0x548] sm:$0xff]
    %v238 = vld [vmem:[#allocation5 + $0x550] sm:$0xff]
    %v239 = vld [vmem:[#allocation5 + $0x558] sm:$0xff]
    %v240 = vld [vmem:[#allocation5 + $0x560] sm:$0xff]
    %v241 = vld [vmem:[#allocation5 + $0x568] sm:$0xff]
    %v242 = vld [vmem:[#allocation5 + $0x570] sm:$0xff]
    %v243 = vld [vmem:[#allocation5 + $0x578] sm:$0xff]
    %v244 = vld [vmem:[#allocation5 + $0x580] sm:$0xff]
    %v245 = vld [vmem:[#allocation5 + $0x588] sm:$0xff]
    %v246 = vld [vmem:[#allocation5 + $0x590] sm:$0xff]
    %v247 = vld [vmem:[#allocation5 + $0x598] sm:$0xff]
    %v248 = vld [vmem:[#allocation5 + $0x5a0] sm:$0xff]
    %v249 = vld [vmem:[#allocation5 + $0x5a8] sm:$0xff]
    %v250 = vld [vmem:[#allocation5 + $0x5b0] sm:$0xff]
    %v251 = vld [vmem:[#allocation5 + $0x5b8] sm:$0xff]
    %v252 = vld [vmem:[#allocation5 + $0x5c0] sm:$0xff]
    %v253 = vld [vmem:[#allocation5 + $0x5c8] sm:$0xff]
    %v254 = vld [vmem:[#allocation5 + $0x5d0] sm:$0xff]
    %v255 = vld [vmem:[#allocation5 + $0x5d8] sm:$0xff]
    %v256 = vld [vmem:[#allocation5 + $0x5e0] sm:$0xff]
    %v257 = vld [vmem:[#allocation5 + $0x5e8] sm:$0xff]
    %v258 = vld [vmem:[#allocation5 + $0x5f0] sm:$0xff]
    %v259 = vld [vmem:[#allocation5 + $0x5f8] sm:$0xff]
    %v260 = vld [vmem:[#allocation5 + $0x600] sm:$0xff]
    %v261 = vld [vmem:[#allocation5 + $0x608] sm:$0xff]
    %v262 = vld [vmem:[#allocation5 + $0x610] sm:$0xff]
    %v263 = vld [vmem:[#allocation5 + $0x618] sm:$0xff]
    %v264 = vld [vmem:[#allocation5 + $0x620] sm:$0xff]
    %v265 = vld [vmem:[#allocation5 + $0x628] sm:$0xff]
    %v266 = vld [vmem:[#allocation5 + $0x630] sm:$0xff]
    %v267 = vld [vmem:[#allocation5 + $0x638] sm:$0xff]
    %v268 = vld [vmem:[#allocation5 + $0x640] sm:$0xff]
    %v269 = vld [vmem:[#allocation5 + $0x648] sm:$0xff]
    %v270 = vld [vmem:[#allocation5 + $0x650] sm:$0xff]
    %v271 = vld [vmem:[#allocation5 + $0x658] sm:$0xff]
    %v272 = vld [vmem:[#allocation5 + $0x660] sm:$0xff]
    %v273 = vld [vmem:[#allocation5 + $0x668] sm:$0xff]
    %v274 = vld [vmem:[#allocation5 + $0x670] sm:$0xff]
    %v275 = vld [vmem:[#allocation5 + $0x678] sm:$0xff]
    %v276 = vld [vmem:[#allocation5 + $0x680] sm:$0xff]
    %v277 = vld [vmem:[#allocation5 + $0x688] sm:$0xff]
    %v278 = vld [vmem:[#allocation5 + $0x690] sm:$0xff]
    %v279 = vld [vmem:[#allocation5 + $0x698] sm:$0xff]
    %v280 = vld [vmem:[#allocation5 + $0x6a0] sm:$0xff]
    %v281 = vld [vmem:[#allocation5 + $0x6a8] sm:$0xff]
    %v282 = vld [vmem:[#allocation5 + $0x6b0] sm:$0xff]
    %v283 = vld [vmem:[#allocation5 + $0x6b8] sm:$0xff]
    %v284 = vld [vmem:[#allocation5 + $0x6c0] sm:$0xff]
    %v285 = vld [vmem:[#allocation5 + $0x6c8] sm:$0xff]
    %v286 = vld [vmem:[#allocation5 + $0x6d0] sm:$0xff]
    %v287 = vld [vmem:[#allocation5 + $0x6d8] sm:$0xff]
    %v288 = vld [vmem:[#allocation5 + $0x6e0] sm:$0xff]
    %v289 = vld [vmem:[#allocation5 + $0x6e8] sm:$0xff]
    %v290 = vld [vmem:[#allocation5 + $0x6f0] sm:$0xff]
    %v291 = vld [vmem:[#allocation5 + $0x6f8] sm:$0xff]
    %v292 = vld [vmem:[#allocation5 + $0x700] sm:$0xff]
    %v293 = vld [vmem:[#allocation5 + $0x708] sm:$0xff]
    %v294 = vld [vmem:[#allocation5 + $0x710] sm:$0xff]
    %v295 = vld [vmem:[#allocation5 + $0x718] sm:$0xff]
    %v296 = vld [vmem:[#allocation5 + $0x720] sm:$0xff]
    %v297 = vld [vmem:[#allocation5 + $0x728] sm:$0xff]
    %v298 = vld [vmem:[#allocation5 + $0x730] sm:$0xff]
    %v299 = vld [vmem:[#allocation5 + $0x738] sm:$0xff]
    %v300 = vld [vmem:[#allocation5 + $0x740] sm:$0xff]
    %v301 = vld [vmem:[#allocation5 + $0x748] sm:$0xff]
    %v302 = vld [vmem:[#allocation5 + $0x750] sm:$0xff]
    %v303 = vld [vmem:[#allocation5 + $0x758] sm:$0xff]
    %v304 = vld [vmem:[#allocation5 + $0x760] sm:$0xff]
    %v305 = vld [vmem:[#allocation5 + $0x768] sm:$0xff]
    %v306 = vld [vmem:[#allocation5 + $0x770] sm:$0xff]
    %v307 = vld [vmem:[#allocation5 + $0x778] sm:$0xff]
    %v308 = vld [vmem:[#allocation5 + $0x780] sm:$0xff]
    %v309 = vld [vmem:[#allocation5 + $0x788] sm:$0xff]
    %v310 = vld [vmem:[#allocation5 + $0x790] sm:$0xff]
    %v311 = vld [vmem:[#allocation5 + $0x798] sm:$0xff]
    %v312 = vld [vmem:[#allocation5 + $0x7a0] sm:$0xff]
    %v313 = vld [vmem:[#allocation5 + $0x7a8] sm:$0xff]
    %v314 = vld [vmem:[#allocation5 + $0x7b0] sm:$0xff]
    %v315 = vld [vmem:[#allocation5 + $0x7b8] sm:$0xff]
    %v316 = vld [vmem:[#allocation5 + $0x7c0] sm:$0xff]
    %v317 = vld [vmem:[#allocation5 + $0x7c8] sm:$0xff]
    %v318 = vld [vmem:[#allocation5 + $0x7d0] sm:$0xff]
    %v319 = vld [vmem:[#allocation5 + $0x7d8] sm:$0xff]
    %v320 = vld [vmem:[#allocation5 + $0x7e0] sm:$0xff]
    %v321 = vld [vmem:[#allocation5 + $0x7e8] sm:$0xff]
    %v322 = vld [vmem:[#allocation5 + $0x7f0] sm:$0xff]
    %v323 = vld [vmem:[#allocation5 + $0x7f8] sm:$0xff]
    %v324 = vld [vmem:[#allocation5 + $0x800] sm:$0xff]
    %v325 = vld [vmem:[#allocation5 + $0x808] sm:$0xff]
    %v326 = vld [vmem:[#allocation5 + $0x810] sm:$0xff]
    %v327 = vld [vmem:[#allocation5 + $0x818] sm:$0xff]
    %v328 = vld [vmem:[#allocation5 + $0x820] sm:$0xff]
    %v329 = vld [vmem:[#allocation5 + $0x828] sm:$0xff]
    %v330 = vld [vmem:[#allocation5 + $0x830] sm:$0xff]
    %v331 = vld [vmem:[#allocation5 + $0x838] sm:$0xff]
    %v332 = vld [vmem:[#allocation5 + $0x840] sm:$0xff]
    %v333 = vld [vmem:[#allocation5 + $0x848] sm:$0xff]
    %v334 = vld [vmem:[#allocation5 + $0x850] sm:$0xff]
    %v335 = vld [vmem:[#allocation5 + $0x858] sm:$0xff]
    %v336 = vld [vmem:[#allocation5 + $0x860] sm:$0xff]
    %v337 = vld [vmem:[#allocation5 + $0x868] sm:$0xff]
    %v338 = vld [vmem:[#allocation5 + $0x870] sm:$0xff]
    %v339 = vld [vmem:[#allocation5 + $0x878] sm:$0xff]
    %v340 = vld [vmem:[#allocation5 + $0x880] sm:$0xff]
    %v341 = vld [vmem:[#allocation5 + $0x888] sm:$0xff]
    %v342 = vld [vmem:[#allocation5 + $0x890] sm:$0xff]
    %v343 = vld [vmem:[#allocation5 + $0x898] sm:$0xff]
    %v344 = vld [vmem:[#allocation5 + $0x8a0] sm:$0xff]
    %v345 = vld [vmem:[#allocation5 + $0x8a8] sm:$0xff]
    %v346 = vld [vmem:[#allocation5 + $0x8b0] sm:$0xff]
    %v347 = vld [vmem:[#allocation5 + $0x8b8] sm:$0xff]
    %v348 = vld [vmem:[#allocation5 + $0x8c0] sm:$0xff]
    %v349 = vld [vmem:[#allocation5 + $0x8c8] sm:$0xff]
    %v350 = vld [vmem:[#allocation5 + $0x8d0] sm:$0xff]
    %v351 = vld [vmem:[#allocation5 + $0x8d8] sm:$0xff]
    %v352 = vld [vmem:[#allocation5 + $0x8e0] sm:$0xff]
    %v353 = vld [vmem:[#allocation5 + $0x8e8] sm:$0xff]
    %v354 = vld [vmem:[#allocation5 + $0x8f0] sm:$0xff]
    %v355 = vld [vmem:[#allocation5 + $0x8f8] sm:$0xff]
    %v356 = vld [vmem:[#allocation5 + $0x900] sm:$0xff]
    %v357 = vld [vmem:[#allocation5 + $0x908] sm:$0xff]
    %v358 = vld [vmem:[#allocation5 + $0x910] sm:$0xff]
    %v359 = vld [vmem:[#allocation5 + $0x918] sm:$0xff]
    %v360 = vld [vmem:[#allocation5 + $0x920] sm:$0xff]
    %v361 = vld [vmem:[#allocation5 + $0x928] sm:$0xff]
    %v362 = vld [vmem:[#allocation5 + $0x930] sm:$0xff]
    %v363 = vld [vmem:[#allocation5 + $0x938] sm:$0xff]
    %v364 = vld [vmem:[#allocation5 + $0x940] sm:$0xff]
    %v365 = vld [vmem:[#allocation5 + $0x948] sm:$0xff]
    %v366 = vld [vmem:[#allocation5 + $0x950] sm:$0xff]
    %v367 = vld [vmem:[#allocation5 + $0x958] sm:$0xff]
    %v368 = vld [vmem:[#allocation5 + $0x960] sm:$0xff]
    %v369 = vld [vmem:[#allocation5 + $0x968] sm:$0xff]
    %v370 = vld [vmem:[#allocation5 + $0x970] sm:$0xff]
    %v371 = vld [vmem:[#allocation5 + $0x978] sm:$0xff]
    %v372 = vld [vmem:[#allocation5 + $0x980] sm:$0xff]
    %v373 = vld [vmem:[#allocation5 + $0x988] sm:$0xff]
    %v374 = vld [vmem:[#allocation5 + $0x990] sm:$0xff]
    %v375 = vld [vmem:[#allocation5 + $0x998] sm:$0xff]
    %v376 = vld [vmem:[#allocation5 + $0x9a0] sm:$0xff]
    %v377 = vld [vmem:[#allocation5 + $0x9a8] sm:$0xff]
    %v378 = vld [vmem:[#allocation5 + $0x9b0] sm:$0xff]
    %v379 = vld [vmem:[#allocation5 + $0x9b8] sm:$0xff]
    %v380 = vld [vmem:[#allocation5 + $0x9c0] sm:$0xff]
    %v381 = vld [vmem:[#allocation5 + $0x9c8] sm:$0xff]
    %v382 = vld [vmem:[#allocation5 + $0x9d0] sm:$0xff]
    %v383 = vld [vmem:[#allocation5 + $0x9d8] sm:$0xff]
    %v384 = vld [vmem:[#allocation5 + $0x9e0] sm:$0xff]
    %v385 = vld [vmem:[#allocation5 + $0x9e8] sm:$0xff]
    %v386 = vld [vmem:[#allocation5 + $0x9f0] sm:$0xff]
    %v387 = vld [vmem:[#allocation5 + $0x9f8] sm:$0xff]
    %v388 = vld [vmem:[#allocation5 + $0xa00] sm:$0xff]
    %v389 = vld [vmem:[#allocation5 + $0xa08] sm:$0xff]
    %v390 = vld [vmem:[#allocation5 + $0xa10] sm:$0xff]
    %v391 = vld [vmem:[#allocation5 + $0xa18] sm:$0xff]
    %v392 = vld [vmem:[#allocation5 + $0xa20] sm:$0xff]
    %v393 = vld [vmem:[#allocation5 + $0xa28] sm:$0xff]
    %v394 = vld [vmem:[#allocation5 + $0xa30] sm:$0xff]
    %v395 = vld [vmem:[#allocation5 + $0xa38] sm:$0xff]
    %v396 = vld [vmem:[#allocation5 + $0xa40] sm:$0xff]
    %v397 = vld [vmem:[#allocation5 + $0xa48] sm:$0xff]
    %v398 = vld [vmem:[#allocation5 + $0xa50] sm:$0xff]
    %v399 = vld [vmem:[#allocation5 + $0xa58] sm:$0xff]
    %v400 = vld [vmem:[#allocation5 + $0xa60] sm:$0xff]
    %v401 = vld [vmem:[#allocation5 + $0xa68] sm:$0xff]
    %v402 = vld [vmem:[#allocation5 + $0xa70] sm:$0xff]
    %v403 = vld [vmem:[#allocation5 + $0xa78] sm:$0xff]
    %v404 = vld [vmem:[#allocation5 + $0xa80] sm:$0xff]
    %v405 = vld [vmem:[#allocation5 + $0xa88] sm:$0xff]
    %v406 = vld [vmem:[#allocation5 + $0xa90] sm:$0xff]
    %v407 = vld [vmem:[#allocation5 + $0xa98] sm:$0xff]
    %v408 = vld [vmem:[#allocation5 + $0xaa0] sm:$0xff]
    %v409 = vld [vmem:[#allocation5 + $0xaa8] sm:$0xff]
    %v410 = vld [vmem:[#allocation5 + $0xab0] sm:$0xff]
    %v411 = vld [vmem:[#allocation5 + $0xab8] sm:$0xff]
    %v412 = vld [vmem:[#allocation5 + $0xac0] sm:$0xff]
    %v413 = vld [vmem:[#allocation5 + $0xac8] sm:$0xff]
    %v414 = vld [vmem:[#allocation5 + $0xad0] sm:$0xff]
    %v415 = vld [vmem:[#allocation5 + $0xad8] sm:$0xff]
    %v416 = vld [vmem:[#allocation5 + $0xae0] sm:$0xff]
    %v417 = vld [vmem:[#allocation5 + $0xae8] sm:$0xff]
    %v418 = vld [vmem:[#allocation5 + $0xaf0] sm:$0xff]
    %v419 = vld [vmem:[#allocation5 + $0xaf8] sm:$0xff]
    %v420 = vld [vmem:[#allocation5 + $0xb00] sm:$0xff]
    %v421 = vld [vmem:[#allocation5 + $0xb08] sm:$0xff]
    %v422 = vld [vmem:[#allocation5 + $0xb10] sm:$0xff]
    %v423 = vld [vmem:[#allocation5 + $0xb18] sm:$0xff]
    %v424 = vld [vmem:[#allocation5 + $0xb20] sm:$0xff]
    %v425 = vld [vmem:[#allocation5 + $0xb28] sm:$0xff]
    %v426 = vld [vmem:[#allocation5 + $0xb30] sm:$0xff]
    %v427 = vld [vmem:[#allocation5 + $0xb38] sm:$0xff]
    %v428 = vld [vmem:[#allocation5 + $0xb40] sm:$0xff]
    %v429 = vld [vmem:[#allocation5 + $0xb48] sm:$0xff]
    %v430 = vld [vmem:[#allocation5 + $0xb50] sm:$0xff]
    %v431 = vld [vmem:[#allocation5 + $0xb58] sm:$0xff]
    %v432 = vld [vmem:[#allocation5 + $0xb60] sm:$0xff]
    %v433 = vld [vmem:[#allocation5 + $0xb68] sm:$0xff]
    %v434 = vld [vmem:[#allocation5 + $0xb70] sm:$0xff]
    %v435 = vld [vmem:[#allocation5 + $0xb78] sm:$0xff]
    %v436 = vld [vmem:[#allocation5 + $0xb80] sm:$0xff]
    %v437 = vld [vmem:[#allocation5 + $0xb88] sm:$0xff]
    %v438 = vld [vmem:[#allocation5 + $0xb90] sm:$0xff]
    %v439 = vld [vmem:[#allocation5 + $0xb98] sm:$0xff]
    %v440 = vld [vmem:[#allocation5 + $0xba0] sm:$0xff]
    %v441 = vld [vmem:[#allocation5 + $0xba8] sm:$0xff]
    %v442 = vld [vmem:[#allocation5 + $0xbb0] sm:$0xff]
    %v443 = vld [vmem:[#allocation5 + $0xbb8] sm:$0xff]
    %v444 = vld [vmem:[#allocation5 + $0xbc0] sm:$0xff]
    %v445 = vld [vmem:[#allocation5 + $0xbc8] sm:$0xff]
    %v446 = vld [vmem:[#allocation5 + $0xbd0] sm:$0xff]
    %v447 = vld [vmem:[#allocation5 + $0xbd8] sm:$0xff]
    %v448 = vld [vmem:[#allocation5 + $0xbe0] sm:$0xff]
    %v449 = vld [vmem:[#allocation5 + $0xbe8] sm:$0xff]
    %v450 = vld [vmem:[#allocation5 + $0xbf0] sm:$0xff]
    %v451 = vld [vmem:[#allocation5 + $0xbf8] sm:$0xff]
    %v452 = vld [vmem:[#allocation7] sm:$0x3f]
    %v454 = vlaneseq
    %v455 = vshrl.u32 %v454, 7
    %v456 = vsub.s32 0, %v455
    %v457 = vrot.slane %v452, %v456
    %v458 = vlaneseq
    %v459 = vshrl.u32 %v458, 7
    %v460 = vsub.s32 1, %v459
    %v461 = vrot.slane %v452, %v460
    %v462 = vlaneseq
    %v463 = vshrl.u32 %v462, 7
    %v464 = vsub.s32 2, %v463
    %v465 = vrot.slane %v452, %v464
    %v466 = vlaneseq
    %v467 = vshrl.u32 %v466, 7
    %v468 = vsub.s32 3, %v467
    %v469 = vrot.slane %v452, %v468
    %v470 = vlaneseq
    %v471 = vshrl.u32 %v470, 7
    %v472 = vsub.s32 4, %v471
    %v473 = vrot.slane %v452, %v472
    %v474 = vlaneseq
    %v475 = vshrl.u32 %v474, 7
    %v476 = vsub.s32 5, %v475
    %v477 = vrot.slane %v452, %v476
    %v868 = vunpack.c.l.b16 %v68
    %v869 = vunpack.c.h.b16 %v68
    %v870 = vunpack.c.l.b16 %v69
    %v871 = vunpack.c.h.b16 %v69
    %v872 = vunpack.c.l.b16 %v70
    %v873 = vunpack.c.h.b16 %v70
    %v874 = vunpack.c.l.b16 %v71
    %v875 = vunpack.c.h.b16 %v71
    %v876 = vunpack.c.l.b16 %v72
    %v877 = vunpack.c.h.b16 %v72
    %v878 = vunpack.c.l.b16 %v73
    %v879 = vunpack.c.h.b16 %v73
    %v880 = vunpack.c.l.b16 %v74
    %v881 = vunpack.c.h.b16 %v74
    %v882 = vunpack.c.l.b16 %v75
    %v883 = vunpack.c.h.b16 %v75
    %v884 = vunpack.c.l.b16 %v76
    %v885 = vunpack.c.h.b16 %v76
    %v886 = vunpack.c.l.b16 %v77
    %v887 = vunpack.c.h.b16 %v77
    %v888 = vunpack.c.l.b16 %v78
    %v889 = vunpack.c.h.b16 %v78
    %v890 = vunpack.c.l.b16 %v79
    %v891 = vunpack.c.h.b16 %v79
    %v892 = vunpack.c.l.b16 %v80
    %v893 = vunpack.c.h.b16 %v80
    %v894 = vunpack.c.l.b16 %v81
    %v895 = vunpack.c.h.b16 %v81
    %v896 = vunpack.c.l.b16 %v82
    %v897 = vunpack.c.h.b16 %v82
    %v898 = vunpack.c.l.b16 %v83
    %v899 = vunpack.c.h.b16 %v83
    %v900 = vunpack.c.l.b16 %v84
    %v901 = vunpack.c.h.b16 %v84
    %v902 = vunpack.c.l.b16 %v85
    %v903 = vunpack.c.h.b16 %v85
    %v904 = vunpack.c.l.b16 %v86
    %v905 = vunpack.c.h.b16 %v86
    %v906 = vunpack.c.l.b16 %v87
    %v907 = vunpack.c.h.b16 %v87
    %v908 = vunpack.c.l.b16 %v88
    %v909 = vunpack.c.h.b16 %v88
    %v910 = vunpack.c.l.b16 %v89
    %v911 = vunpack.c.h.b16 %v89
    %v912 = vunpack.c.l.b16 %v90
    %v913 = vunpack.c.h.b16 %v90
    %v914 = vunpack.c.l.b16 %v91
    %v915 = vunpack.c.h.b16 %v91
    %v916 = vunpack.c.l.b16 %v92
    %v917 = vunpack.c.h.b16 %v92
    %v918 = vunpack.c.l.b16 %v93
    %v919 = vunpack.c.h.b16 %v93
    %v920 = vunpack.c.l.b16 %v94
    %v921 = vunpack.c.h.b16 %v94
    %v922 = vunpack.c.l.b16 %v95
    %v923 = vunpack.c.h.b16 %v95
    %v924 = vunpack.c.l.b16 %v96
    %v925 = vunpack.c.h.b16 %v96
    %v926 = vunpack.c.l.b16 %v97
    %v927 = vunpack.c.h.b16 %v97
    %v928 = vunpack.c.l.b16 %v98
    %v929 = vunpack.c.h.b16 %v98
    %v930 = vunpack.c.l.b16 %v99
    %v931 = vunpack.c.h.b16 %v99
    %v932 = vunpack.c.l.b16 %v100
    %v933 = vunpack.c.h.b16 %v100
    %v934 = vunpack.c.l.b16 %v101
    %v935 = vunpack.c.h.b16 %v101
    %v936 = vunpack.c.l.b16 %v102
    %v937 = vunpack.c.h.b16 %v102
    %v938 = vunpack.c.l.b16 %v103
    %v939 = vunpack.c.h.b16 %v103
    %v940 = vunpack.c.l.b16 %v104
    %v941 = vunpack.c.h.b16 %v104
    %v942 = vunpack.c.l.b16 %v105
    %v943 = vunpack.c.h.b16 %v105
    %v944 = vunpack.c.l.b16 %v106
    %v945 = vunpack.c.h.b16 %v106
    %v946 = vunpack.c.l.b16 %v107
    %v947 = vunpack.c.h.b16 %v107
    %v948 = vunpack.c.l.b16 %v108
    %v949 = vunpack.c.h.b16 %v108
    %v950 = vunpack.c.l.b16 %v109
    %v951 = vunpack.c.h.b16 %v109
    %v952 = vunpack.c.l.b16 %v110
    %v953 = vunpack.c.h.b16 %v110
    %v954 = vunpack.c.l.b16 %v111
    %v955 = vunpack.c.h.b16 %v111
    %v956 = vunpack.c.l.b16 %v112
    %v957 = vunpack.c.h.b16 %v112
    %v958 = vunpack.c.l.b16 %v113
    %v959 = vunpack.c.h.b16 %v113
    %v960 = vunpack.c.l.b16 %v114
    %v961 = vunpack.c.h.b16 %v114
    %v962 = vunpack.c.l.b16 %v115
    %v963 = vunpack.c.h.b16 %v115
    %v964 = vunpack.c.l.b16 %v116
    %v965 = vunpack.c.h.b16 %v116
    %v966 = vunpack.c.l.b16 %v117
    %v967 = vunpack.c.h.b16 %v117
    %v968 = vunpack.c.l.b16 %v118
    %v969 = vunpack.c.h.b16 %v118
    %v970 = vunpack.c.l.b16 %v119
    %v971 = vunpack.c.h.b16 %v119
    %v972 = vunpack.c.l.b16 %v120
    %v973 = vunpack.c.h.b16 %v120
    %v974 = vunpack.c.l.b16 %v121
    %v975 = vunpack.c.h.b16 %v121
    %v976 = vunpack.c.l.b16 %v122
    %v977 = vunpack.c.h.b16 %v122
    %v978 = vunpack.c.l.b16 %v123
    %v979 = vunpack.c.h.b16 %v123
    %v980 = vunpack.c.l.b16 %v124
    %v981 = vunpack.c.h.b16 %v124
    %v982 = vunpack.c.l.b16 %v125
    %v983 = vunpack.c.h.b16 %v125
    %v984 = vunpack.c.l.b16 %v126
    %v985 = vunpack.c.h.b16 %v126
    %v986 = vunpack.c.l.b16 %v127
    %v987 = vunpack.c.h.b16 %v127
    %v988 = vunpack.c.l.b16 %v128
    %v989 = vunpack.c.h.b16 %v128
    %v990 = vunpack.c.l.b16 %v129
    %v991 = vunpack.c.h.b16 %v129
    %v992 = vunpack.c.l.b16 %v130
    %v993 = vunpack.c.h.b16 %v130
    %v994 = vunpack.c.l.b16 %v131
    %v995 = vunpack.c.h.b16 %v131
    %v996 = vunpack.c.l.b16 %v132
    %v997 = vunpack.c.h.b16 %v132
    %v998 = vunpack.c.l.b16 %v133
    %v999 = vunpack.c.h.b16 %v133
    %v1000 = vunpack.c.l.b16 %v134
    %v1001 = vunpack.c.h.b16 %v134
    %v1002 = vunpack.c.l.b16 %v135
    %v1003 = vunpack.c.h.b16 %v135
    %v1004 = vunpack.c.l.b16 %v136
    %v1005 = vunpack.c.h.b16 %v136
    %v1006 = vunpack.c.l.b16 %v137
    %v1007 = vunpack.c.h.b16 %v137
    %v1008 = vunpack.c.l.b16 %v138
    %v1009 = vunpack.c.h.b16 %v138
    %v1010 = vunpack.c.l.b16 %v139
    %v1011 = vunpack.c.h.b16 %v139
    %v1012 = vunpack.c.l.b16 %v140
    %v1013 = vunpack.c.h.b16 %v140
    %v1014 = vunpack.c.l.b16 %v141
    %v1015 = vunpack.c.h.b16 %v141
    %v1016 = vunpack.c.l.b16 %v142
    %v1017 = vunpack.c.h.b16 %v142
    %v1018 = vunpack.c.l.b16 %v143
    %v1019 = vunpack.c.h.b16 %v143
    %v1020 = vunpack.c.l.b16 %v144
    %v1021 = vunpack.c.h.b16 %v144
    %v1022 = vunpack.c.l.b16 %v145
    %v1023 = vunpack.c.h.b16 %v145
    %v1024 = vunpack.c.l.b16 %v146
    %v1025 = vunpack.c.h.b16 %v146
    %v1026 = vunpack.c.l.b16 %v147
    %v1027 = vunpack.c.h.b16 %v147
    %v1028 = vunpack.c.l.b16 %v148
    %v1029 = vunpack.c.h.b16 %v148
    %v1030 = vunpack.c.l.b16 %v149
    %v1031 = vunpack.c.h.b16 %v149
    %v1032 = vunpack.c.l.b16 %v150
    %v1033 = vunpack.c.h.b16 %v150
    %v1034 = vunpack.c.l.b16 %v151
    %v1035 = vunpack.c.h.b16 %v151
    %v1036 = vunpack.c.l.b16 %v152
    %v1037 = vunpack.c.h.b16 %v152
    %v1038 = vunpack.c.l.b16 %v153
    %v1039 = vunpack.c.h.b16 %v153
    %v1040 = vunpack.c.l.b16 %v154
    %v1041 = vunpack.c.h.b16 %v154
    %v1042 = vunpack.c.l.b16 %v155
    %v1043 = vunpack.c.h.b16 %v155
    %v1044 = vunpack.c.l.b16 %v156
    %v1045 = vunpack.c.h.b16 %v156
    %v1046 = vunpack.c.l.b16 %v157
    %v1047 = vunpack.c.h.b16 %v157
    %v1048 = vunpack.c.l.b16 %v158
    %v1049 = vunpack.c.h.b16 %v158
    %v1050 = vunpack.c.l.b16 %v159
    %v1051 = vunpack.c.h.b16 %v159
    %v1052 = vunpack.c.l.b16 %v160
    %v1053 = vunpack.c.h.b16 %v160
    %v1054 = vunpack.c.l.b16 %v161
    %v1055 = vunpack.c.h.b16 %v161
    %v1056 = vunpack.c.l.b16 %v162
    %v1057 = vunpack.c.h.b16 %v162
    %v1058 = vunpack.c.l.b16 %v163
    %v1059 = vunpack.c.h.b16 %v163
    %v1060 = vunpack.c.l.b16 %v164
    %v1061 = vunpack.c.h.b16 %v164
    %v1062 = vunpack.c.l.b16 %v165
    %v1063 = vunpack.c.h.b16 %v165
    %v1064 = vunpack.c.l.b16 %v166
    %v1065 = vunpack.c.h.b16 %v166
    %v1066 = vunpack.c.l.b16 %v167
    %v1067 = vunpack.c.h.b16 %v167
    %v1068 = vunpack.c.l.b16 %v168
    %v1069 = vunpack.c.h.b16 %v168
    %v1070 = vunpack.c.l.b16 %v169
    %v1071 = vunpack.c.h.b16 %v169
    %v1072 = vunpack.c.l.b16 %v170
    %v1073 = vunpack.c.h.b16 %v170
    %v1074 = vunpack.c.l.b16 %v171
    %v1075 = vunpack.c.h.b16 %v171
    %v1076 = vunpack.c.l.b16 %v172
    %v1077 = vunpack.c.h.b16 %v172
    %v1078 = vunpack.c.l.b16 %v173
    %v1079 = vunpack.c.h.b16 %v173
    %v1080 = vunpack.c.l.b16 %v174
    %v1081 = vunpack.c.h.b16 %v174
    %v1082 = vunpack.c.l.b16 %v175
    %v1083 = vunpack.c.h.b16 %v175
    %v1084 = vunpack.c.l.b16 %v176
    %v1085 = vunpack.c.h.b16 %v176
    %v1086 = vunpack.c.l.b16 %v177
    %v1087 = vunpack.c.h.b16 %v177
    %v1088 = vunpack.c.l.b16 %v178
    %v1089 = vunpack.c.h.b16 %v178
    %v1090 = vunpack.c.l.b16 %v179
    %v1091 = vunpack.c.h.b16 %v179
    %v1092 = vunpack.c.l.b16 %v180
    %v1093 = vunpack.c.h.b16 %v180
    %v1094 = vunpack.c.l.b16 %v181
    %v1095 = vunpack.c.h.b16 %v181
    %v1096 = vunpack.c.l.b16 %v182
    %v1097 = vunpack.c.h.b16 %v182
    %v1098 = vunpack.c.l.b16 %v183
    %v1099 = vunpack.c.h.b16 %v183
    %v1100 = vunpack.c.l.b16 %v184
    %v1101 = vunpack.c.h.b16 %v184
    %v1102 = vunpack.c.l.b16 %v185
    %v1103 = vunpack.c.h.b16 %v185
    %v1104 = vunpack.c.l.b16 %v186
    %v1105 = vunpack.c.h.b16 %v186
    %v1106 = vunpack.c.l.b16 %v187
    %v1107 = vunpack.c.h.b16 %v187
    %v1108 = vunpack.c.l.b16 %v188
    %v1109 = vunpack.c.h.b16 %v188
    %v1110 = vunpack.c.l.b16 %v189
    %v1111 = vunpack.c.h.b16 %v189
    %v1112 = vunpack.c.l.b16 %v190
    %v1113 = vunpack.c.h.b16 %v190
    %v1114 = vunpack.c.l.b16 %v191
    %v1115 = vunpack.c.h.b16 %v191
    %v1116 = vunpack.c.l.b16 %v192
    %v1117 = vunpack.c.h.b16 %v192
    %v1118 = vunpack.c.l.b16 %v193
    %v1119 = vunpack.c.h.b16 %v193
    %v1120 = vunpack.c.l.b16 %v194
    %v1121 = vunpack.c.h.b16 %v194
    %v1122 = vunpack.c.l.b16 %v195
    %v1123 = vunpack.c.h.b16 %v195
    %v1124 = vunpack.c.l.b16 %v196
    %v1125 = vunpack.c.h.b16 %v196
    %v1126 = vunpack.c.l.b16 %v197
    %v1127 = vunpack.c.h.b16 %v197
    %v1128 = vunpack.c.l.b16 %v198
    %v1129 = vunpack.c.h.b16 %v198
    %v1130 = vunpack.c.l.b16 %v199
    %v1131 = vunpack.c.h.b16 %v199
    %v1132 = vunpack.c.l.b16 %v200
    %v1133 = vunpack.c.h.b16 %v200
    %v1134 = vunpack.c.l.b16 %v201
    %v1135 = vunpack.c.h.b16 %v201
    %v1136 = vunpack.c.l.b16 %v202
    %v1137 = vunpack.c.h.b16 %v202
    %v1138 = vunpack.c.l.b16 %v203
    %v1139 = vunpack.c.h.b16 %v203
    %v1140 = vunpack.c.l.b16 %v204
    %v1141 = vunpack.c.h.b16 %v204
    %v1142 = vunpack.c.l.b16 %v205
    %v1143 = vunpack.c.h.b16 %v205
    %v1144 = vunpack.c.l.b16 %v206
    %v1145 = vunpack.c.h.b16 %v206
    %v1146 = vunpack.c.l.b16 %v207
    %v1147 = vunpack.c.h.b16 %v207
    %v1148 = vunpack.c.l.b16 %v208
    %v1149 = vunpack.c.h.b16 %v208
    %v1150 = vunpack.c.l.b16 %v209
    %v1151 = vunpack.c.h.b16 %v209
    %v1152 = vunpack.c.l.b16 %v210
    %v1153 = vunpack.c.h.b16 %v210
    %v1154 = vunpack.c.l.b16 %v211
    %v1155 = vunpack.c.h.b16 %v211
    %v1156 = vunpack.c.l.b16 %v212
    %v1157 = vunpack.c.h.b16 %v212
    %v1158 = vunpack.c.l.b16 %v213
    %v1159 = vunpack.c.h.b16 %v213
    %v1160 = vunpack.c.l.b16 %v214
    %v1161 = vunpack.c.h.b16 %v214
    %v1162 = vunpack.c.l.b16 %v215
    %v1163 = vunpack.c.h.b16 %v215
    %v1164 = vunpack.c.l.b16 %v216
    %v1165 = vunpack.c.h.b16 %v216
    %v1166 = vunpack.c.l.b16 %v217
    %v1167 = vunpack.c.h.b16 %v217
    %v1168 = vunpack.c.l.b16 %v218
    %v1169 = vunpack.c.h.b16 %v218
    %v1170 = vunpack.c.l.b16 %v219
    %v1171 = vunpack.c.h.b16 %v219
    %v1172 = vunpack.c.l.b16 %v220
    %v1173 = vunpack.c.h.b16 %v220
    %v1174 = vunpack.c.l.b16 %v221
    %v1175 = vunpack.c.h.b16 %v221
    %v1176 = vunpack.c.l.b16 %v222
    %v1177 = vunpack.c.h.b16 %v222
    %v1178 = vunpack.c.l.b16 %v223
    %v1179 = vunpack.c.h.b16 %v223
    %v1180 = vunpack.c.l.b16 %v224
    %v1181 = vunpack.c.h.b16 %v224
    %v1182 = vunpack.c.l.b16 %v225
    %v1183 = vunpack.c.h.b16 %v225
    %v1184 = vunpack.c.l.b16 %v226
    %v1185 = vunpack.c.h.b16 %v226
    %v1186 = vunpack.c.l.b16 %v227
    %v1187 = vunpack.c.h.b16 %v227
    %v1188 = vunpack.c.l.b16 %v228
    %v1189 = vunpack.c.h.b16 %v228
    %v1190 = vunpack.c.l.b16 %v229
    %v1191 = vunpack.c.h.b16 %v229
    %v1192 = vunpack.c.l.b16 %v230
    %v1193 = vunpack.c.h.b16 %v230
    %v1194 = vunpack.c.l.b16 %v231
    %v1195 = vunpack.c.h.b16 %v231
    %v1196 = vunpack.c.l.b16 %v232
    %v1197 = vunpack.c.h.b16 %v232
    %v1198 = vunpack.c.l.b16 %v233
    %v1199 = vunpack.c.h.b16 %v233
    %v1200 = vunpack.c.l.b16 %v234
    %v1201 = vunpack.c.h.b16 %v234
    %v1202 = vunpack.c.l.b16 %v235
    %v1203 = vunpack.c.h.b16 %v235
    %v1204 = vunpack.c.l.b16 %v236
    %v1205 = vunpack.c.h.b16 %v236
    %v1206 = vunpack.c.l.b16 %v237
    %v1207 = vunpack.c.h.b16 %v237
    %v1208 = vunpack.c.l.b16 %v238
    %v1209 = vunpack.c.h.b16 %v238
    %v1210 = vunpack.c.l.b16 %v239
    %v1211 = vunpack.c.h.b16 %v239
    %v1212 = vunpack.c.l.b16 %v240
    %v1213 = vunpack.c.h.b16 %v240
    %v1214 = vunpack.c.l.b16 %v241
    %v1215 = vunpack.c.h.b16 %v241
    %v1216 = vunpack.c.l.b16 %v242
    %v1217 = vunpack.c.h.b16 %v242
    %v1218 = vunpack.c.l.b16 %v243
    %v1219 = vunpack.c.h.b16 %v243
    %v1220 = vunpack.c.l.b16 %v244
    %v1221 = vunpack.c.h.b16 %v244
    %v1222 = vunpack.c.l.b16 %v245
    %v1223 = vunpack.c.h.b16 %v245
    %v1224 = vunpack.c.l.b16 %v246
    %v1225 = vunpack.c.h.b16 %v246
    %v1226 = vunpack.c.l.b16 %v247
    %v1227 = vunpack.c.h.b16 %v247
    %v1228 = vunpack.c.l.b16 %v248
    %v1229 = vunpack.c.h.b16 %v248
    %v1230 = vunpack.c.l.b16 %v249
    %v1231 = vunpack.c.h.b16 %v249
    %v1232 = vunpack.c.l.b16 %v250
    %v1233 = vunpack.c.h.b16 %v250
    %v1234 = vunpack.c.l.b16 %v251
    %v1235 = vunpack.c.h.b16 %v251
    %v1236 = vunpack.c.l.b16 %v252
    %v1237 = vunpack.c.h.b16 %v252
    %v1238 = vunpack.c.l.b16 %v253
    %v1239 = vunpack.c.h.b16 %v253
    %v1240 = vunpack.c.l.b16 %v254
    %v1241 = vunpack.c.h.b16 %v254
    %v1242 = vunpack.c.l.b16 %v255
    %v1243 = vunpack.c.h.b16 %v255
    %v1244 = vunpack.c.l.b16 %v256
    %v1245 = vunpack.c.h.b16 %v256
    %v1246 = vunpack.c.l.b16 %v257
    %v1247 = vunpack.c.h.b16 %v257
    %v1248 = vunpack.c.l.b16 %v258
    %v1249 = vunpack.c.h.b16 %v258
    %v1250 = vunpack.c.l.b16 %v259
    %v1251 = vunpack.c.h.b16 %v259
    %v1252 = vunpack.c.l.b16 %v260
    %v1253 = vunpack.c.h.b16 %v260
    %v1254 = vunpack.c.l.b16 %v261
    %v1255 = vunpack.c.h.b16 %v261
    %v1256 = vunpack.c.l.b16 %v262
    %v1257 = vunpack.c.h.b16 %v262
    %v1258 = vunpack.c.l.b16 %v263
    %v1259 = vunpack.c.h.b16 %v263
    %v1260 = vunpack.c.l.b16 %v264
    %v1261 = vunpack.c.h.b16 %v264
    %v1262 = vunpack.c.l.b16 %v265
    %v1263 = vunpack.c.h.b16 %v265
    %v1264 = vunpack.c.l.b16 %v266
    %v1265 = vunpack.c.h.b16 %v266
    %v1266 = vunpack.c.l.b16 %v267
    %v1267 = vunpack.c.h.b16 %v267
    %v1268 = vunpack.c.l.b16 %v268
    %v1269 = vunpack.c.h.b16 %v268
    %v1270 = vunpack.c.l.b16 %v269
    %v1271 = vunpack.c.h.b16 %v269
    %v1272 = vunpack.c.l.b16 %v270
    %v1273 = vunpack.c.h.b16 %v270
    %v1274 = vunpack.c.l.b16 %v271
    %v1275 = vunpack.c.h.b16 %v271
    %v1276 = vunpack.c.l.b16 %v272
    %v1277 = vunpack.c.h.b16 %v272
    %v1278 = vunpack.c.l.b16 %v273
    %v1279 = vunpack.c.h.b16 %v273
    %v1280 = vunpack.c.l.b16 %v274
    %v1281 = vunpack.c.h.b16 %v274
    %v1282 = vunpack.c.l.b16 %v275
    %v1283 = vunpack.c.h.b16 %v275
    %v1284 = vunpack.c.l.b16 %v276
    %v1285 = vunpack.c.h.b16 %v276
    %v1286 = vunpack.c.l.b16 %v277
    %v1287 = vunpack.c.h.b16 %v277
    %v1288 = vunpack.c.l.b16 %v278
    %v1289 = vunpack.c.h.b16 %v278
    %v1290 = vunpack.c.l.b16 %v279
    %v1291 = vunpack.c.h.b16 %v279
    %v1292 = vunpack.c.l.b16 %v280
    %v1293 = vunpack.c.h.b16 %v280
    %v1294 = vunpack.c.l.b16 %v281
    %v1295 = vunpack.c.h.b16 %v281
    %v1296 = vunpack.c.l.b16 %v282
    %v1297 = vunpack.c.h.b16 %v282
    %v1298 = vunpack.c.l.b16 %v283
    %v1299 = vunpack.c.h.b16 %v283
    %v1300 = vunpack.c.l.b16 %v284
    %v1301 = vunpack.c.h.b16 %v284
    %v1302 = vunpack.c.l.b16 %v285
    %v1303 = vunpack.c.h.b16 %v285
    %v1304 = vunpack.c.l.b16 %v286
    %v1305 = vunpack.c.h.b16 %v286
    %v1306 = vunpack.c.l.b16 %v287
    %v1307 = vunpack.c.h.b16 %v287
    %v1308 = vunpack.c.l.b16 %v288
    %v1309 = vunpack.c.h.b16 %v288
    %v1310 = vunpack.c.l.b16 %v289
    %v1311 = vunpack.c.h.b16 %v289
    %v1312 = vunpack.c.l.b16 %v290
    %v1313 = vunpack.c.h.b16 %v290
    %v1314 = vunpack.c.l.b16 %v291
    %v1315 = vunpack.c.h.b16 %v291
    %v1316 = vunpack.c.l.b16 %v292
    %v1317 = vunpack.c.h.b16 %v292
    %v1318 = vunpack.c.l.b16 %v293
    %v1319 = vunpack.c.h.b16 %v293
    %v1320 = vunpack.c.l.b16 %v294
    %v1321 = vunpack.c.h.b16 %v294
    %v1322 = vunpack.c.l.b16 %v295
    %v1323 = vunpack.c.h.b16 %v295
    %v1324 = vunpack.c.l.b16 %v296
    %v1325 = vunpack.c.h.b16 %v296
    %v1326 = vunpack.c.l.b16 %v297
    %v1327 = vunpack.c.h.b16 %v297
    %v1328 = vunpack.c.l.b16 %v298
    %v1329 = vunpack.c.h.b16 %v298
    %v1330 = vunpack.c.l.b16 %v299
    %v1331 = vunpack.c.h.b16 %v299
    %v1332 = vunpack.c.l.b16 %v300
    %v1333 = vunpack.c.h.b16 %v300
    %v1334 = vunpack.c.l.b16 %v301
    %v1335 = vunpack.c.h.b16 %v301
    %v1336 = vunpack.c.l.b16 %v302
    %v1337 = vunpack.c.h.b16 %v302
    %v1338 = vunpack.c.l.b16 %v303
    %v1339 = vunpack.c.h.b16 %v303
    %v1340 = vunpack.c.l.b16 %v304
    %v1341 = vunpack.c.h.b16 %v304
    %v1342 = vunpack.c.l.b16 %v305
    %v1343 = vunpack.c.h.b16 %v305
    %v1344 = vunpack.c.l.b16 %v306
    %v1345 = vunpack.c.h.b16 %v306
    %v1346 = vunpack.c.l.b16 %v307
    %v1347 = vunpack.c.h.b16 %v307
    %v1348 = vunpack.c.l.b16 %v308
    %v1349 = vunpack.c.h.b16 %v308
    %v1350 = vunpack.c.l.b16 %v309
    %v1351 = vunpack.c.h.b16 %v309
    %v1352 = vunpack.c.l.b16 %v310
    %v1353 = vunpack.c.h.b16 %v310
    %v1354 = vunpack.c.l.b16 %v311
    %v1355 = vunpack.c.h.b16 %v311
    %v1356 = vunpack.c.l.b16 %v312
    %v1357 = vunpack.c.h.b16 %v312
    %v1358 = vunpack.c.l.b16 %v313
    %v1359 = vunpack.c.h.b16 %v313
    %v1360 = vunpack.c.l.b16 %v314
    %v1361 = vunpack.c.h.b16 %v314
    %v1362 = vunpack.c.l.b16 %v315
    %v1363 = vunpack.c.h.b16 %v315
    %v1364 = vunpack.c.l.b16 %v316
    %v1365 = vunpack.c.h.b16 %v316
    %v1366 = vunpack.c.l.b16 %v317
    %v1367 = vunpack.c.h.b16 %v317
    %v1368 = vunpack.c.l.b16 %v318
    %v1369 = vunpack.c.h.b16 %v318
    %v1370 = vunpack.c.l.b16 %v319
    %v1371 = vunpack.c.h.b16 %v319
    %v1372 = vunpack.c.l.b16 %v320
    %v1373 = vunpack.c.h.b16 %v320
    %v1374 = vunpack.c.l.b16 %v321
    %v1375 = vunpack.c.h.b16 %v321
    %v1376 = vunpack.c.l.b16 %v322
    %v1377 = vunpack.c.h.b16 %v322
    %v1378 = vunpack.c.l.b16 %v323
    %v1379 = vunpack.c.h.b16 %v323
    %v1380 = vunpack.c.l.b16 %v324
    %v1381 = vunpack.c.h.b16 %v324
    %v1382 = vunpack.c.l.b16 %v325
    %v1383 = vunpack.c.h.b16 %v325
    %v1384 = vunpack.c.l.b16 %v326
    %v1385 = vunpack.c.h.b16 %v326
    %v1386 = vunpack.c.l.b16 %v327
    %v1387 = vunpack.c.h.b16 %v327
    %v1388 = vunpack.c.l.b16 %v328
    %v1389 = vunpack.c.h.b16 %v328
    %v1390 = vunpack.c.l.b16 %v329
    %v1391 = vunpack.c.h.b16 %v329
    %v1392 = vunpack.c.l.b16 %v330
    %v1393 = vunpack.c.h.b16 %v330
    %v1394 = vunpack.c.l.b16 %v331
    %v1395 = vunpack.c.h.b16 %v331
    %v1396 = vunpack.c.l.b16 %v332
    %v1397 = vunpack.c.h.b16 %v332
    %v1398 = vunpack.c.l.b16 %v333
    %v1399 = vunpack.c.h.b16 %v333
    %v1400 = vunpack.c.l.b16 %v334
    %v1401 = vunpack.c.h.b16 %v334
    %v1402 = vunpack.c.l.b16 %v335
    %v1403 = vunpack.c.h.b16 %v335
    %v1404 = vunpack.c.l.b16 %v336
    %v1405 = vunpack.c.h.b16 %v336
    %v1406 = vunpack.c.l.b16 %v337
    %v1407 = vunpack.c.h.b16 %v337
    %v1408 = vunpack.c.l.b16 %v338
    %v1409 = vunpack.c.h.b16 %v338
    %v1410 = vunpack.c.l.b16 %v339
    %v1411 = vunpack.c.h.b16 %v339
    %v1412 = vunpack.c.l.b16 %v340
    %v1413 = vunpack.c.h.b16 %v340
    %v1414 = vunpack.c.l.b16 %v341
    %v1415 = vunpack.c.h.b16 %v341
    %v1416 = vunpack.c.l.b16 %v342
    %v1417 = vunpack.c.h.b16 %v342
    %v1418 = vunpack.c.l.b16 %v343
    %v1419 = vunpack.c.h.b16 %v343
    %v1420 = vunpack.c.l.b16 %v344
    %v1421 = vunpack.c.h.b16 %v344
    %v1422 = vunpack.c.l.b16 %v345
    %v1423 = vunpack.c.h.b16 %v345
    %v1424 = vunpack.c.l.b16 %v346
    %v1425 = vunpack.c.h.b16 %v346
    %v1426 = vunpack.c.l.b16 %v347
    %v1427 = vunpack.c.h.b16 %v347
    %v1428 = vunpack.c.l.b16 %v348
    %v1429 = vunpack.c.h.b16 %v348
    %v1430 = vunpack.c.l.b16 %v349
    %v1431 = vunpack.c.h.b16 %v349
    %v1432 = vunpack.c.l.b16 %v350
    %v1433 = vunpack.c.h.b16 %v350
    %v1434 = vunpack.c.l.b16 %v351
    %v1435 = vunpack.c.h.b16 %v351
    %v1436 = vunpack.c.l.b16 %v352
    %v1437 = vunpack.c.h.b16 %v352
    %v1438 = vunpack.c.l.b16 %v353
    %v1439 = vunpack.c.h.b16 %v353
    %v1440 = vunpack.c.l.b16 %v354
    %v1441 = vunpack.c.h.b16 %v354
    %v1442 = vunpack.c.l.b16 %v355
    %v1443 = vunpack.c.h.b16 %v355
    %v1444 = vunpack.c.l.b16 %v356
    %v1445 = vunpack.c.h.b16 %v356
    %v1446 = vunpack.c.l.b16 %v357
    %v1447 = vunpack.c.h.b16 %v357
    %v1448 = vunpack.c.l.b16 %v358
    %v1449 = vunpack.c.h.b16 %v358
    %v1450 = vunpack.c.l.b16 %v359
    %v1451 = vunpack.c.h.b16 %v359
    %v1452 = vunpack.c.l.b16 %v360
    %v1453 = vunpack.c.h.b16 %v360
    %v1454 = vunpack.c.l.b16 %v361
    %v1455 = vunpack.c.h.b16 %v361
    %v1456 = vunpack.c.l.b16 %v362
    %v1457 = vunpack.c.h.b16 %v362
    %v1458 = vunpack.c.l.b16 %v363
    %v1459 = vunpack.c.h.b16 %v363
    %v1460 = vunpack.c.l.b16 %v364
    %v1461 = vunpack.c.h.b16 %v364
    %v1462 = vunpack.c.l.b16 %v365
    %v1463 = vunpack.c.h.b16 %v365
    %v1464 = vunpack.c.l.b16 %v366
    %v1465 = vunpack.c.h.b16 %v366
    %v1466 = vunpack.c.l.b16 %v367
    %v1467 = vunpack.c.h.b16 %v367
    %v1468 = vunpack.c.l.b16 %v368
    %v1469 = vunpack.c.h.b16 %v368
    %v1470 = vunpack.c.l.b16 %v369
    %v1471 = vunpack.c.h.b16 %v369
    %v1472 = vunpack.c.l.b16 %v370
    %v1473 = vunpack.c.h.b16 %v370
    %v1474 = vunpack.c.l.b16 %v371
    %v1475 = vunpack.c.h.b16 %v371
    %v1476 = vunpack.c.l.b16 %v372
    %v1477 = vunpack.c.h.b16 %v372
    %v1478 = vunpack.c.l.b16 %v373
    %v1479 = vunpack.c.h.b16 %v373
    %v1480 = vunpack.c.l.b16 %v374
    %v1481 = vunpack.c.h.b16 %v374
    %v1482 = vunpack.c.l.b16 %v375
    %v1483 = vunpack.c.h.b16 %v375
    %v1484 = vunpack.c.l.b16 %v376
    %v1485 = vunpack.c.h.b16 %v376
    %v1486 = vunpack.c.l.b16 %v377
    %v1487 = vunpack.c.h.b16 %v377
    %v1488 = vunpack.c.l.b16 %v378
    %v1489 = vunpack.c.h.b16 %v378
    %v1490 = vunpack.c.l.b16 %v379
    %v1491 = vunpack.c.h.b16 %v379
    %v1492 = vunpack.c.l.b16 %v380
    %v1493 = vunpack.c.h.b16 %v380
    %v1494 = vunpack.c.l.b16 %v381
    %v1495 = vunpack.c.h.b16 %v381
    %v1496 = vunpack.c.l.b16 %v382
    %v1497 = vunpack.c.h.b16 %v382
    %v1498 = vunpack.c.l.b16 %v383
    %v1499 = vunpack.c.h.b16 %v383
    %v1500 = vunpack.c.l.b16 %v384
    %v1501 = vunpack.c.h.b16 %v384
    %v1502 = vunpack.c.l.b16 %v385
    %v1503 = vunpack.c.h.b16 %v385
    %v1504 = vunpack.c.l.b16 %v386
    %v1505 = vunpack.c.h.b16 %v386
    %v1506 = vunpack.c.l.b16 %v387
    %v1507 = vunpack.c.h.b16 %v387
    %v1508 = vunpack.c.l.b16 %v388
    %v1509 = vunpack.c.h.b16 %v388
    %v1510 = vunpack.c.l.b16 %v389
    %v1511 = vunpack.c.h.b16 %v389
    %v1512 = vunpack.c.l.b16 %v390
    %v1513 = vunpack.c.h.b16 %v390
    %v1514 = vunpack.c.l.b16 %v391
    %v1515 = vunpack.c.h.b16 %v391
    %v1516 = vunpack.c.l.b16 %v392
    %v1517 = vunpack.c.h.b16 %v392
    %v1518 = vunpack.c.l.b16 %v393
    %v1519 = vunpack.c.h.b16 %v393
    %v1520 = vunpack.c.l.b16 %v394
    %v1521 = vunpack.c.h.b16 %v394
    %v1522 = vunpack.c.l.b16 %v395
    %v1523 = vunpack.c.h.b16 %v395
    %v1524 = vunpack.c.l.b16 %v396
    %v1525 = vunpack.c.h.b16 %v396
    %v1526 = vunpack.c.l.b16 %v397
    %v1527 = vunpack.c.h.b16 %v397
    %v1528 = vunpack.c.l.b16 %v398
    %v1529 = vunpack.c.h.b16 %v398
    %v1530 = vunpack.c.l.b16 %v399
    %v1531 = vunpack.c.h.b16 %v399
    %v1532 = vunpack.c.l.b16 %v400
    %v1533 = vunpack.c.h.b16 %v400
    %v1534 = vunpack.c.l.b16 %v401
    %v1535 = vunpack.c.h.b16 %v401
    %v1536 = vunpack.c.l.b16 %v402
    %v1537 = vunpack.c.h.b16 %v402
    %v1538 = vunpack.c.l.b16 %v403
    %v1539 = vunpack.c.h.b16 %v403
    %v1540 = vunpack.c.l.b16 %v404
    %v1541 = vunpack.c.h.b16 %v404
    %v1542 = vunpack.c.l.b16 %v405
    %v1543 = vunpack.c.h.b16 %v405
    %v1544 = vunpack.c.l.b16 %v406
    %v1545 = vunpack.c.h.b16 %v406
    %v1546 = vunpack.c.l.b16 %v407
    %v1547 = vunpack.c.h.b16 %v407
    %v1548 = vunpack.c.l.b16 %v408
    %v1549 = vunpack.c.h.b16 %v408
    %v1550 = vunpack.c.l.b16 %v409
    %v1551 = vunpack.c.h.b16 %v409
    %v1552 = vunpack.c.l.b16 %v410
    %v1553 = vunpack.c.h.b16 %v410
    %v1554 = vunpack.c.l.b16 %v411
    %v1555 = vunpack.c.h.b16 %v411
    %v1556 = vunpack.c.l.b16 %v412
    %v1557 = vunpack.c.h.b16 %v412
    %v1558 = vunpack.c.l.b16 %v413
    %v1559 = vunpack.c.h.b16 %v413
    %v1560 = vunpack.c.l.b16 %v414
    %v1561 = vunpack.c.h.b16 %v414
    %v1562 = vunpack.c.l.b16 %v415
    %v1563 = vunpack.c.h.b16 %v415
    %v1564 = vunpack.c.l.b16 %v416
    %v1565 = vunpack.c.h.b16 %v416
    %v1566 = vunpack.c.l.b16 %v417
    %v1567 = vunpack.c.h.b16 %v417
    %v1568 = vunpack.c.l.b16 %v418
    %v1569 = vunpack.c.h.b16 %v418
    %v1570 = vunpack.c.l.b16 %v419
    %v1571 = vunpack.c.h.b16 %v419
    %v1572 = vunpack.c.l.b16 %v420
    %v1573 = vunpack.c.h.b16 %v420
    %v1574 = vunpack.c.l.b16 %v421
    %v1575 = vunpack.c.h.b16 %v421
    %v1576 = vunpack.c.l.b16 %v422
    %v1577 = vunpack.c.h.b16 %v422
    %v1578 = vunpack.c.l.b16 %v423
    %v1579 = vunpack.c.h.b16 %v423
    %v1580 = vunpack.c.l.b16 %v424
    %v1581 = vunpack.c.h.b16 %v424
    %v1582 = vunpack.c.l.b16 %v425
    %v1583 = vunpack.c.h.b16 %v425
    %v1584 = vunpack.c.l.b16 %v426
    %v1585 = vunpack.c.h.b16 %v426
    %v1586 = vunpack.c.l.b16 %v427
    %v1587 = vunpack.c.h.b16 %v427
    %v1588 = vunpack.c.l.b16 %v428
    %v1589 = vunpack.c.h.b16 %v428
    %v1590 = vunpack.c.l.b16 %v429
    %v1591 = vunpack.c.h.b16 %v429
    %v1592 = vunpack.c.l.b16 %v430
    %v1593 = vunpack.c.h.b16 %v430
    %v1594 = vunpack.c.l.b16 %v431
    %v1595 = vunpack.c.h.b16 %v431
    %v1596 = vunpack.c.l.b16 %v432
    %v1597 = vunpack.c.h.b16 %v432
    %v1598 = vunpack.c.l.b16 %v433
    %v1599 = vunpack.c.h.b16 %v433
    %v1600 = vunpack.c.l.b16 %v434
    %v1601 = vunpack.c.h.b16 %v434
    %v1602 = vunpack.c.l.b16 %v435
    %v1603 = vunpack.c.h.b16 %v435
    %v1604 = vunpack.c.l.b16 %v436
    %v1605 = vunpack.c.h.b16 %v436
    %v1606 = vunpack.c.l.b16 %v437
    %v1607 = vunpack.c.h.b16 %v437
    %v1608 = vunpack.c.l.b16 %v438
    %v1609 = vunpack.c.h.b16 %v438
    %v1610 = vunpack.c.l.b16 %v439
    %v1611 = vunpack.c.h.b16 %v439
    %v1612 = vunpack.c.l.b16 %v440
    %v1613 = vunpack.c.h.b16 %v440
    %v1614 = vunpack.c.l.b16 %v441
    %v1615 = vunpack.c.h.b16 %v441
    %v1616 = vunpack.c.l.b16 %v442
    %v1617 = vunpack.c.h.b16 %v442
    %v1618 = vunpack.c.l.b16 %v443
    %v1619 = vunpack.c.h.b16 %v443
    %v1620 = vunpack.c.l.b16 %v444
    %v1621 = vunpack.c.h.b16 %v444
    %v1622 = vunpack.c.l.b16 %v445
    %v1623 = vunpack.c.h.b16 %v445
    %v1624 = vunpack.c.l.b16 %v446
    %v1625 = vunpack.c.h.b16 %v446
    %v1626 = vunpack.c.l.b16 %v447
    %v1627 = vunpack.c.h.b16 %v447
    %v1628 = vunpack.c.l.b16 %v448
    %v1629 = vunpack.c.h.b16 %v448
    %v1630 = vunpack.c.l.b16 %v449
    %v1631 = vunpack.c.h.b16 %v449
    %v1632 = vunpack.c.l.b16 %v450
    %v1633 = vunpack.c.h.b16 %v450
    %v1634 = vunpack.c.l.b16 %v451
    %v1635 = vunpack.c.h.b16 %v451
    %v1636 = vpack.c.b16 %v874, %v868
    %v1637 = vpack.c.b16 %v875, %v869
    %v1638 = vpack.c.b16 %v876, %v870
    %v1639 = vpack.c.b16 %v877, %v871
    %v1640 = vpack.c.b16 %v878, %v872
    %v1641 = vpack.c.b16 %v879, %v873
    %v1642 = vpack.c.b16 %v886, %v880
    %v1643 = vpack.c.b16 %v887, %v881
    %v1644 = vpack.c.b16 %v888, %v882
    %v1645 = vpack.c.b16 %v889, %v883
    %v1646 = vpack.c.b16 %v890, %v884
    %v1647 = vpack.c.b16 %v891, %v885
    %v1648 = vpack.c.b16 %v898, %v892
    %v1649 = vpack.c.b16 %v899, %v893
    %v1650 = vpack.c.b16 %v900, %v894
    %v1651 = vpack.c.b16 %v901, %v895
    %v1652 = vpack.c.b16 %v902, %v896
    %v1653 = vpack.c.b16 %v903, %v897
    %v1654 = vpack.c.b16 %v910, %v904
    %v1655 = vpack.c.b16 %v911, %v905
    %v1656 = vpack.c.b16 %v912, %v906
    %v1657 = vpack.c.b16 %v913, %v907
    %v1658 = vpack.c.b16 %v914, %v908
    %v1659 = vpack.c.b16 %v915, %v909
    %v1660 = vpack.c.b16 %v922, %v916
    %v1661 = vpack.c.b16 %v923, %v917
    %v1662 = vpack.c.b16 %v924, %v918
    %v1663 = vpack.c.b16 %v925, %v919
    %v1664 = vpack.c.b16 %v926, %v920
    %v1665 = vpack.c.b16 %v927, %v921
    %v1666 = vpack.c.b16 %v934, %v928
    %v1667 = vpack.c.b16 %v935, %v929
    %v1668 = vpack.c.b16 %v936, %v930
    %v1669 = vpack.c.b16 %v937, %v931
    %v1670 = vpack.c.b16 %v938, %v932
    %v1671 = vpack.c.b16 %v939, %v933
    %v1672 = vpack.c.b16 %v946, %v940
    %v1673 = vpack.c.b16 %v947, %v941
    %v1674 = vpack.c.b16 %v948, %v942
    %v1675 = vpack.c.b16 %v949, %v943
    %v1676 = vpack.c.b16 %v950, %v944
    %v1677 = vpack.c.b16 %v951, %v945
    %v1678 = vpack.c.b16 %v958, %v952
    %v1679 = vpack.c.b16 %v959, %v953
    %v1680 = vpack.c.b16 %v960, %v954
    %v1681 = vpack.c.b16 %v961, %v955
    %v1682 = vpack.c.b16 %v962, %v956
    %v1683 = vpack.c.b16 %v963, %v957
    %v1684 = vpack.c.b16 %v970, %v964
    %v1685 = vpack.c.b16 %v971, %v965
    %v1686 = vpack.c.b16 %v972, %v966
    %v1687 = vpack.c.b16 %v973, %v967
    %v1688 = vpack.c.b16 %v974, %v968
    %v1689 = vpack.c.b16 %v975, %v969
    %v1690 = vpack.c.b16 %v982, %v976
    %v1691 = vpack.c.b16 %v983, %v977
    %v1692 = vpack.c.b16 %v984, %v978
    %v1693 = vpack.c.b16 %v985, %v979
    %v1694 = vpack.c.b16 %v986, %v980
    %v1695 = vpack.c.b16 %v987, %v981
    %v1696 = vpack.c.b16 %v994, %v988
    %v1697 = vpack.c.b16 %v995, %v989
    %v1698 = vpack.c.b16 %v996, %v990
    %v1699 = vpack.c.b16 %v997, %v991
    %v1700 = vpack.c.b16 %v998, %v992
    %v1701 = vpack.c.b16 %v999, %v993
    %v1702 = vpack.c.b16 %v1006, %v1000
    %v1703 = vpack.c.b16 %v1007, %v1001
    %v1704 = vpack.c.b16 %v1008, %v1002
    %v1705 = vpack.c.b16 %v1009, %v1003
    %v1706 = vpack.c.b16 %v1010, %v1004
    %v1707 = vpack.c.b16 %v1011, %v1005
    %v1708 = vpack.c.b16 %v1018, %v1012
    %v1709 = vpack.c.b16 %v1019, %v1013
    %v1710 = vpack.c.b16 %v1020, %v1014
    %v1711 = vpack.c.b16 %v1021, %v1015
    %v1712 = vpack.c.b16 %v1022, %v1016
    %v1713 = vpack.c.b16 %v1023, %v1017
    %v1714 = vpack.c.b16 %v1030, %v1024
    %v1715 = vpack.c.b16 %v1031, %v1025
    %v1716 = vpack.c.b16 %v1032, %v1026
    %v1717 = vpack.c.b16 %v1033, %v1027
    %v1718 = vpack.c.b16 %v1034, %v1028
    %v1719 = vpack.c.b16 %v1035, %v1029
    %v1720 = vpack.c.b16 %v1042, %v1036
    %v1721 = vpack.c.b16 %v1043, %v1037
    %v1722 = vpack.c.b16 %v1044, %v1038
    %v1723 = vpack.c.b16 %v1045, %v1039
    %v1724 = vpack.c.b16 %v1046, %v1040
    %v1725 = vpack.c.b16 %v1047, %v1041
    %v1726 = vpack.c.b16 %v1054, %v1048
    %v1727 = vpack.c.b16 %v1055, %v1049
    %v1728 = vpack.c.b16 %v1056, %v1050
    %v1729 = vpack.c.b16 %v1057, %v1051
    %v1730 = vpack.c.b16 %v1058, %v1052
    %v1731 = vpack.c.b16 %v1059, %v1053
    %v1732 = vpack.c.b16 %v1066, %v1060
    %v1733 = vpack.c.b16 %v1067, %v1061
    %v1734 = vpack.c.b16 %v1068, %v1062
    %v1735 = vpack.c.b16 %v1069, %v1063
    %v1736 = vpack.c.b16 %v1070, %v1064
    %v1737 = vpack.c.b16 %v1071, %v1065
    %v1738 = vpack.c.b16 %v1078, %v1072
    %v1739 = vpack.c.b16 %v1079, %v1073
    %v1740 = vpack.c.b16 %v1080, %v1074
    %v1741 = vpack.c.b16 %v1081, %v1075
    %v1742 = vpack.c.b16 %v1082, %v1076
    %v1743 = vpack.c.b16 %v1083, %v1077
    %v1744 = vpack.c.b16 %v1090, %v1084
    %v1745 = vpack.c.b16 %v1091, %v1085
    %v1746 = vpack.c.b16 %v1092, %v1086
    %v1747 = vpack.c.b16 %v1093, %v1087
    %v1748 = vpack.c.b16 %v1094, %v1088
    %v1749 = vpack.c.b16 %v1095, %v1089
    %v1750 = vpack.c.b16 %v1102, %v1096
    %v1751 = vpack.c.b16 %v1103, %v1097
    %v1752 = vpack.c.b16 %v1104, %v1098
    %v1753 = vpack.c.b16 %v1105, %v1099
    %v1754 = vpack.c.b16 %v1106, %v1100
    %v1755 = vpack.c.b16 %v1107, %v1101
    %v1756 = vpack.c.b16 %v1114, %v1108
    %v1757 = vpack.c.b16 %v1115, %v1109
    %v1758 = vpack.c.b16 %v1116, %v1110
    %v1759 = vpack.c.b16 %v1117, %v1111
    %v1760 = vpack.c.b16 %v1118, %v1112
    %v1761 = vpack.c.b16 %v1119, %v1113
    %v1762 = vpack.c.b16 %v1126, %v1120
    %v1763 = vpack.c.b16 %v1127, %v1121
    %v1764 = vpack.c.b16 %v1128, %v1122
    %v1765 = vpack.c.b16 %v1129, %v1123
    %v1766 = vpack.c.b16 %v1130, %v1124
    %v1767 = vpack.c.b16 %v1131, %v1125
    %v1768 = vpack.c.b16 %v1138, %v1132
    %v1769 = vpack.c.b16 %v1139, %v1133
    %v1770 = vpack.c.b16 %v1140, %v1134
    %v1771 = vpack.c.b16 %v1141, %v1135
    %v1772 = vpack.c.b16 %v1142, %v1136
    %v1773 = vpack.c.b16 %v1143, %v1137
    %v1774 = vpack.c.b16 %v1150, %v1144
    %v1775 = vpack.c.b16 %v1151, %v1145
    %v1776 = vpack.c.b16 %v1152, %v1146
    %v1777 = vpack.c.b16 %v1153, %v1147
    %v1778 = vpack.c.b16 %v1154, %v1148
    %v1779 = vpack.c.b16 %v1155, %v1149
    %v1780 = vpack.c.b16 %v1162, %v1156
    %v1781 = vpack.c.b16 %v1163, %v1157
    %v1782 = vpack.c.b16 %v1164, %v1158
    %v1783 = vpack.c.b16 %v1165, %v1159
    %v1784 = vpack.c.b16 %v1166, %v1160
    %v1785 = vpack.c.b16 %v1167, %v1161
    %v1786 = vpack.c.b16 %v1174, %v1168
    %v1787 = vpack.c.b16 %v1175, %v1169
    %v1788 = vpack.c.b16 %v1176, %v1170
    %v1789 = vpack.c.b16 %v1177, %v1171
    %v1790 = vpack.c.b16 %v1178, %v1172
    %v1791 = vpack.c.b16 %v1179, %v1173
    %v1792 = vpack.c.b16 %v1186, %v1180
    %v1793 = vpack.c.b16 %v1187, %v1181
    %v1794 = vpack.c.b16 %v1188, %v1182
    %v1795 = vpack.c.b16 %v1189, %v1183
    %v1796 = vpack.c.b16 %v1190, %v1184
    %v1797 = vpack.c.b16 %v1191, %v1185
    %v1798 = vpack.c.b16 %v1198, %v1192
    %v1799 = vpack.c.b16 %v1199, %v1193
    %v1800 = vpack.c.b16 %v1200, %v1194
    %v1801 = vpack.c.b16 %v1201, %v1195
    %v1802 = vpack.c.b16 %v1202, %v1196
    %v1803 = vpack.c.b16 %v1203, %v1197
    %v1804 = vpack.c.b16 %v1210, %v1204
    %v1805 = vpack.c.b16 %v1211, %v1205
    %v1806 = vpack.c.b16 %v1212, %v1206
    %v1807 = vpack.c.b16 %v1213, %v1207
    %v1808 = vpack.c.b16 %v1214, %v1208
    %v1809 = vpack.c.b16 %v1215, %v1209
    %v1810 = vpack.c.b16 %v1222, %v1216
    %v1811 = vpack.c.b16 %v1223, %v1217
    %v1812 = vpack.c.b16 %v1224, %v1218
    %v1813 = vpack.c.b16 %v1225, %v1219
    %v1814 = vpack.c.b16 %v1226, %v1220
    %v1815 = vpack.c.b16 %v1227, %v1221
    %v1816 = vpack.c.b16 %v1234, %v1228
    %v1817 = vpack.c.b16 %v1235, %v1229
    %v1818 = vpack.c.b16 %v1236, %v1230
    %v1819 = vpack.c.b16 %v1237, %v1231
    %v1820 = vpack.c.b16 %v1238, %v1232
    %v1821 = vpack.c.b16 %v1239, %v1233
    %v1822 = vpack.c.b16 %v1246, %v1240
    %v1823 = vpack.c.b16 %v1247, %v1241
    %v1824 = vpack.c.b16 %v1248, %v1242
    %v1825 = vpack.c.b16 %v1249, %v1243
    %v1826 = vpack.c.b16 %v1250, %v1244
    %v1827 = vpack.c.b16 %v1251, %v1245
    %v1828 = vpack.c.b16 %v1258, %v1252
    %v1829 = vpack.c.b16 %v1259, %v1253
    %v1830 = vpack.c.b16 %v1260, %v1254
    %v1831 = vpack.c.b16 %v1261, %v1255
    %v1832 = vpack.c.b16 %v1262, %v1256
    %v1833 = vpack.c.b16 %v1263, %v1257
    %v1834 = vpack.c.b16 %v1270, %v1264
    %v1835 = vpack.c.b16 %v1271, %v1265
    %v1836 = vpack.c.b16 %v1272, %v1266
    %v1837 = vpack.c.b16 %v1273, %v1267
    %v1838 = vpack.c.b16 %v1274, %v1268
    %v1839 = vpack.c.b16 %v1275, %v1269
    %v1840 = vpack.c.b16 %v1282, %v1276
    %v1841 = vpack.c.b16 %v1283, %v1277
    %v1842 = vpack.c.b16 %v1284, %v1278
    %v1843 = vpack.c.b16 %v1285, %v1279
    %v1844 = vpack.c.b16 %v1286, %v1280
    %v1845 = vpack.c.b16 %v1287, %v1281
    %v1846 = vpack.c.b16 %v1294, %v1288
    %v1847 = vpack.c.b16 %v1295, %v1289
    %v1848 = vpack.c.b16 %v1296, %v1290
    %v1849 = vpack.c.b16 %v1297, %v1291
    %v1850 = vpack.c.b16 %v1298, %v1292
    %v1851 = vpack.c.b16 %v1299, %v1293
    %v1852 = vpack.c.b16 %v1306, %v1300
    %v1853 = vpack.c.b16 %v1307, %v1301
    %v1854 = vpack.c.b16 %v1308, %v1302
    %v1855 = vpack.c.b16 %v1309, %v1303
    %v1856 = vpack.c.b16 %v1310, %v1304
    %v1857 = vpack.c.b16 %v1311, %v1305
    %v1858 = vpack.c.b16 %v1318, %v1312
    %v1859 = vpack.c.b16 %v1319, %v1313
    %v1860 = vpack.c.b16 %v1320, %v1314
    %v1861 = vpack.c.b16 %v1321, %v1315
    %v1862 = vpack.c.b16 %v1322, %v1316
    %v1863 = vpack.c.b16 %v1323, %v1317
    %v1864 = vpack.c.b16 %v1330, %v1324
    %v1865 = vpack.c.b16 %v1331, %v1325
    %v1866 = vpack.c.b16 %v1332, %v1326
    %v1867 = vpack.c.b16 %v1333, %v1327
    %v1868 = vpack.c.b16 %v1334, %v1328
    %v1869 = vpack.c.b16 %v1335, %v1329
    %v1870 = vpack.c.b16 %v1342, %v1336
    %v1871 = vpack.c.b16 %v1343, %v1337
    %v1872 = vpack.c.b16 %v1344, %v1338
    %v1873 = vpack.c.b16 %v1345, %v1339
    %v1874 = vpack.c.b16 %v1346, %v1340
    %v1875 = vpack.c.b16 %v1347, %v1341
    %v1876 = vpack.c.b16 %v1354, %v1348
    %v1877 = vpack.c.b16 %v1355, %v1349
    %v1878 = vpack.c.b16 %v1356, %v1350
    %v1879 = vpack.c.b16 %v1357, %v1351
    %v1880 = vpack.c.b16 %v1358, %v1352
    %v1881 = vpack.c.b16 %v1359, %v1353
    %v1882 = vpack.c.b16 %v1366, %v1360
    %v1883 = vpack.c.b16 %v1367, %v1361
    %v1884 = vpack.c.b16 %v1368, %v1362
    %v1885 = vpack.c.b16 %v1369, %v1363
    %v1886 = vpack.c.b16 %v1370, %v1364
    %v1887 = vpack.c.b16 %v1371, %v1365
    %v1888 = vpack.c.b16 %v1378, %v1372
    %v1889 = vpack.c.b16 %v1379, %v1373
    %v1890 = vpack.c.b16 %v1380, %v1374
    %v1891 = vpack.c.b16 %v1381, %v1375
    %v1892 = vpack.c.b16 %v1382, %v1376
    %v1893 = vpack.c.b16 %v1383, %v1377
    %v1894 = vpack.c.b16 %v1390, %v1384
    %v1895 = vpack.c.b16 %v1391, %v1385
    %v1896 = vpack.c.b16 %v1392, %v1386
    %v1897 = vpack.c.b16 %v1393, %v1387
    %v1898 = vpack.c.b16 %v1394, %v1388
    %v1899 = vpack.c.b16 %v1395, %v1389
    %v1900 = vpack.c.b16 %v1402, %v1396
    %v1901 = vpack.c.b16 %v1403, %v1397
    %v1902 = vpack.c.b16 %v1404, %v1398
    %v1903 = vpack.c.b16 %v1405, %v1399
    %v1904 = vpack.c.b16 %v1406, %v1400
    %v1905 = vpack.c.b16 %v1407, %v1401
    %v1906 = vpack.c.b16 %v1414, %v1408
    %v1907 = vpack.c.b16 %v1415, %v1409
    %v1908 = vpack.c.b16 %v1416, %v1410
    %v1909 = vpack.c.b16 %v1417, %v1411
    %v1910 = vpack.c.b16 %v1418, %v1412
    %v1911 = vpack.c.b16 %v1419, %v1413
    %v1912 = vpack.c.b16 %v1426, %v1420
    %v1913 = vpack.c.b16 %v1427, %v1421
    %v1914 = vpack.c.b16 %v1428, %v1422
    %v1915 = vpack.c.b16 %v1429, %v1423
    %v1916 = vpack.c.b16 %v1430, %v1424
    %v1917 = vpack.c.b16 %v1431, %v1425
    %v1918 = vpack.c.b16 %v1438, %v1432
    %v1919 = vpack.c.b16 %v1439, %v1433
    %v1920 = vpack.c.b16 %v1440, %v1434
    %v1921 = vpack.c.b16 %v1441, %v1435
    %v1922 = vpack.c.b16 %v1442, %v1436
    %v1923 = vpack.c.b16 %v1443, %v1437
    %v1924 = vpack.c.b16 %v1450, %v1444
    %v1925 = vpack.c.b16 %v1451, %v1445
    %v1926 = vpack.c.b16 %v1452, %v1446
    %v1927 = vpack.c.b16 %v1453, %v1447
    %v1928 = vpack.c.b16 %v1454, %v1448
    %v1929 = vpack.c.b16 %v1455, %v1449
    %v1930 = vpack.c.b16 %v1462, %v1456
    %v1931 = vpack.c.b16 %v1463, %v1457
    %v1932 = vpack.c.b16 %v1464, %v1458
    %v1933 = vpack.c.b16 %v1465, %v1459
    %v1934 = vpack.c.b16 %v1466, %v1460
    %v1935 = vpack.c.b16 %v1467, %v1461
    %v1936 = vpack.c.b16 %v1474, %v1468
    %v1937 = vpack.c.b16 %v1475, %v1469
    %v1938 = vpack.c.b16 %v1476, %v1470
    %v1939 = vpack.c.b16 %v1477, %v1471
    %v1940 = vpack.c.b16 %v1478, %v1472
    %v1941 = vpack.c.b16 %v1479, %v1473
    %v1942 = vpack.c.b16 %v1486, %v1480
    %v1943 = vpack.c.b16 %v1487, %v1481
    %v1944 = vpack.c.b16 %v1488, %v1482
    %v1945 = vpack.c.b16 %v1489, %v1483
    %v1946 = vpack.c.b16 %v1490, %v1484
    %v1947 = vpack.c.b16 %v1491, %v1485
    %v1948 = vpack.c.b16 %v1498, %v1492
    %v1949 = vpack.c.b16 %v1499, %v1493
    %v1950 = vpack.c.b16 %v1500, %v1494
    %v1951 = vpack.c.b16 %v1501, %v1495
    %v1952 = vpack.c.b16 %v1502, %v1496
    %v1953 = vpack.c.b16 %v1503, %v1497
    %v1954 = vpack.c.b16 %v1510, %v1504
    %v1955 = vpack.c.b16 %v1511, %v1505
    %v1956 = vpack.c.b16 %v1512, %v1506
    %v1957 = vpack.c.b16 %v1513, %v1507
    %v1958 = vpack.c.b16 %v1514, %v1508
    %v1959 = vpack.c.b16 %v1515, %v1509
    %v1960 = vpack.c.b16 %v1522, %v1516
    %v1961 = vpack.c.b16 %v1523, %v1517
    %v1962 = vpack.c.b16 %v1524, %v1518
    %v1963 = vpack.c.b16 %v1525, %v1519
    %v1964 = vpack.c.b16 %v1526, %v1520
    %v1965 = vpack.c.b16 %v1527, %v1521
    %v1966 = vpack.c.b16 %v1534, %v1528
    %v1967 = vpack.c.b16 %v1535, %v1529
    %v1968 = vpack.c.b16 %v1536, %v1530
    %v1969 = vpack.c.b16 %v1537, %v1531
    %v1970 = vpack.c.b16 %v1538, %v1532
    %v1971 = vpack.c.b16 %v1539, %v1533
    %v1972 = vpack.c.b16 %v1546, %v1540
    %v1973 = vpack.c.b16 %v1547, %v1541
    %v1974 = vpack.c.b16 %v1548, %v1542
    %v1975 = vpack.c.b16 %v1549, %v1543
    %v1976 = vpack.c.b16 %v1550, %v1544
    %v1977 = vpack.c.b16 %v1551, %v1545
    %v1978 = vpack.c.b16 %v1558, %v1552
    %v1979 = vpack.c.b16 %v1559, %v1553
    %v1980 = vpack.c.b16 %v1560, %v1554
    %v1981 = vpack.c.b16 %v1561, %v1555
    %v1982 = vpack.c.b16 %v1562, %v1556
    %v1983 = vpack.c.b16 %v1563, %v1557
    %v1984 = vpack.c.b16 %v1570, %v1564
    %v1985 = vpack.c.b16 %v1571, %v1565
    %v1986 = vpack.c.b16 %v1572, %v1566
    %v1987 = vpack.c.b16 %v1573, %v1567
    %v1988 = vpack.c.b16 %v1574, %v1568
    %v1989 = vpack.c.b16 %v1575, %v1569
    %v1990 = vpack.c.b16 %v1582, %v1576
    %v1991 = vpack.c.b16 %v1583, %v1577
    %v1992 = vpack.c.b16 %v1584, %v1578
    %v1993 = vpack.c.b16 %v1585, %v1579
    %v1994 = vpack.c.b16 %v1586, %v1580
    %v1995 = vpack.c.b16 %v1587, %v1581
    %v1996 = vpack.c.b16 %v1594, %v1588
    %v1997 = vpack.c.b16 %v1595, %v1589
    %v1998 = vpack.c.b16 %v1596, %v1590
    %v1999 = vpack.c.b16 %v1597, %v1591
    %v2000 = vpack.c.b16 %v1598, %v1592
    %v2001 = vpack.c.b16 %v1599, %v1593
    %v2002 = vpack.c.b16 %v1606, %v1600
    %v2003 = vpack.c.b16 %v1607, %v1601
    %v2004 = vpack.c.b16 %v1608, %v1602
    %v2005 = vpack.c.b16 %v1609, %v1603
    %v2006 = vpack.c.b16 %v1610, %v1604
    %v2007 = vpack.c.b16 %v1611, %v1605
    %v2008 = vpack.c.b16 %v1618, %v1612
    %v2009 = vpack.c.b16 %v1619, %v1613
    %v2010 = vpack.c.b16 %v1620, %v1614
    %v2011 = vpack.c.b16 %v1621, %v1615
    %v2012 = vpack.c.b16 %v1622, %v1616
    %v2013 = vpack.c.b16 %v1623, %v1617
    %v2014 = vpack.c.b16 %v1630, %v1624
    %v2015 = vpack.c.b16 %v1631, %v1625
    %v2016 = vpack.c.b16 %v1632, %v1626
    %v2017 = vpack.c.b16 %v1633, %v1627
    %v2018 = vpack.c.b16 %v1634, %v1628
    %v2019 = vpack.c.b16 %v1635, %v1629
    %2404 = vmatprep.subr.bf16.mxu0 %v1637
    %2405 = vmatpush1.bf16.msra.mxu0 %v1636
    %2406 = vmatprep.subr.bf16.mxu0 %v1643
    %2407 = vmatpush1.bf16.msra.mxu0 %v1642
    %2408 = vmatprep.subr.bf16.mxu0 %v1649
    %2409 = vmatpush1.bf16.msra.mxu0 %v1648
    %2410 = vmatprep.subr.bf16.mxu0 %v1655
    %2411 = vmatpush1.bf16.msra.mxu0 %v1654
    %2412 = vmatprep.subr.bf16.mxu0 %v1661
    %2413 = vmatpush1.bf16.msra.mxu0 %v1660
    %2414 = vmatprep.subr.bf16.mxu0 %v1667
    %2415 = vmatpush1.bf16.msra.mxu0 %v1666
    %2416 = vmatprep.subr.bf16.mxu0 %v1673
    %2417 = vmatpush1.bf16.msra.mxu0 %v1672
    %2418 = vmatprep.subr.bf16.mxu0 %v1679
    %2419 = vmatpush1.bf16.msra.mxu0 %v1678
    %2420 = vmatprep.subr.bf16.mxu0 %v1685
    %2421 = vmatpush1.bf16.msra.mxu0 %v1684
    %2422 = vmatprep.subr.bf16.mxu0 %v1691
    %2423 = vmatpush1.bf16.msra.mxu0 %v1690
    %2424 = vmatprep.subr.bf16.mxu0 %v1697
    %2425 = vmatpush1.bf16.msra.mxu0 %v1696
    %2426 = vmatprep.subr.bf16.mxu0 %v1703
    %2427 = vmatpush1.bf16.msra.mxu0 %v1702
    %2428 = vmatprep.subr.bf16.mxu0 %v1709
    %2429 = vmatpush1.bf16.msra.mxu0 %v1708
    %2430 = vmatprep.subr.bf16.mxu0 %v1715
    %2431 = vmatpush1.bf16.msra.mxu0 %v1714
    %2432 = vmatprep.subr.bf16.mxu0 %v1721
    %2433 = vmatpush1.bf16.msra.mxu0 %v1720
    %2434 = vmatprep.subr.bf16.mxu0 %v1727
    %2435 = vmatpush1.bf16.msra.mxu0 %v1726
    %2436 = vmatprep.mubr.bf16.mxu0 %v61
    %2437 = vmatmul.mubr.bf16.gmra.mrb[0].mxu0 %v60
    %v2438 = vpop.f32.mrb[0].mxu0
    %v2439 = vadd.f32 %v457, %v2438
    %v2440 = vpop.f32.mrb[0].mxu0
    %v2441 = vadd.f32 %v461, %v2440
    %v2442 = vpop.f32.mrb[0].mxu0
    %v2443 = vpop.f32.mrb[0].mxu0
    %2444 = vdwg.mxu0
    %2445 = vmatprep.subr.bf16.mxu0 %v1733
    %2446 = vmatpush1.bf16.msra.mxu0 %v1732
    %2447 = vmatprep.subr.bf16.mxu0 %v1739
    %2448 = vmatpush1.bf16.msra.mxu0 %v1738
    %2449 = vmatprep.subr.bf16.mxu0 %v1745
    %2450 = vmatpush1.bf16.msra.mxu0 %v1744
    %2451 = vmatprep.subr.bf16.mxu0 %v1751
    %2452 = vmatpush1.bf16.msra.mxu0 %v1750
    %2453 = vmatprep.subr.bf16.mxu0 %v1757
    %2454 = vmatpush1.bf16.msra.mxu0 %v1756
    %2455 = vmatprep.subr.bf16.mxu0 %v1763
    %2456 = vmatpush1.bf16.msra.mxu0 %v1762
    %2457 = vmatprep.subr.bf16.mxu0 %v1769
    %2458 = vmatpush1.bf16.msra.mxu0 %v1768
    %2459 = vmatprep.subr.bf16.mxu0 %v1775
    %2460 = vmatpush1.bf16.msra.mxu0 %v1774
    %2461 = vmatprep.subr.bf16.mxu0 %v1781
    %2462 = vmatpush1.bf16.msra.mxu0 %v1780
    %2463 = vmatprep.subr.bf16.mxu0 %v1787
    %2464 = vmatpush1.bf16.msra.mxu0 %v1786
    %2465 = vmatprep.subr.bf16.mxu0 %v1793
    %2466 = vmatpush1.bf16.msra.mxu0 %v1792
    %2467 = vmatprep.subr.bf16.mxu0 %v1799
    %2468 = vmatpush1.bf16.msra.mxu0 %v1798
    %2469 = vmatprep.subr.bf16.mxu0 %v1805
    %2470 = vmatpush1.bf16.msra.mxu0 %v1804
    %2471 = vmatprep.subr.bf16.mxu0 %v1811
    %2472 = vmatpush1.bf16.msra.mxu0 %v1810
    %2473 = vmatprep.subr.bf16.mxu0 %v1817
    %2474 = vmatpush1.bf16.msra.mxu0 %v1816
    %2475 = vmatprep.subr.bf16.mxu0 %v1823
    %2476 = vmatpush1.bf16.msra.mxu0 %v1822
    %2477 = vmatprep.mubr.bf16.mxu0 %v63
    %2478 = vmatmul.mubr.bf16.gmra.mrb[0].mxu0 %v62
    %v2479 = vpop.f32.mrb[0].mxu0
    %v2480 = vadd.f32 %v2439, %v2479
    %v2481 = vpop.f32.mrb[0].mxu0
    %v2482 = vadd.f32 %v2441, %v2481
    %v2483 = vpop.f32.mrb[0].mxu0
    %v2484 = vpop.f32.mrb[0].mxu0
    %2485 = vdwg.mxu0
    %2486 = vmatprep.subr.bf16.mxu0 %v1829
    %2487 = vmatpush1.bf16.msra.mxu0 %v1828
    %2488 = vmatprep.subr.bf16.mxu0 %v1835
    %2489 = vmatpush1.bf16.msra.mxu0 %v1834
    %2490 = vmatprep.subr.bf16.mxu0 %v1841
    %2491 = vmatpush1.bf16.msra.mxu0 %v1840
    %2492 = vmatprep.subr.bf16.mxu0 %v1847
    %2493 = vmatpush1.bf16.msra.mxu0 %v1846
    %2494 = vmatprep.subr.bf16.mxu0 %v1853
    %2495 = vmatpush1.bf16.msra.mxu0 %v1852
    %2496 = vmatprep.subr.bf16.mxu0 %v1859
    %2497 = vmatpush1.bf16.msra.mxu0 %v1858
    %2498 = vmatprep.subr.bf16.mxu0 %v1865
    %2499 = vmatpush1.bf16.msra.mxu0 %v1864
    %2500 = vmatprep.subr.bf16.mxu0 %v1871
    %2501 = vmatpush1.bf16.msra.mxu0 %v1870
    %2502 = vmatprep.subr.bf16.mxu0 %v1877
    %2503 = vmatpush1.bf16.msra.mxu0 %v1876
    %2504 = vmatprep.subr.bf16.mxu0 %v1883
    %2505 = vmatpush1.bf16.msra.mxu0 %v1882
    %2506 = vmatprep.subr.bf16.mxu0 %v1889
    %2507 = vmatpush1.bf16.msra.mxu0 %v1888
    %2508 = vmatprep.subr.bf16.mxu0 %v1895
    %2509 = vmatpush1.bf16.msra.mxu0 %v1894
    %2510 = vmatprep.subr.bf16.mxu0 %v1901
    %2511 = vmatpush1.bf16.msra.mxu0 %v1900
    %2512 = vmatprep.subr.bf16.mxu0 %v1907
    %2513 = vmatpush1.bf16.msra.mxu0 %v1906
    %2514 = vmatprep.subr.bf16.mxu0 %v1913
    %2515 = vmatpush1.bf16.msra.mxu0 %v1912
    %2516 = vmatprep.subr.bf16.mxu0 %v1919
    %2517 = vmatpush1.bf16.msra.mxu0 %v1918
    %2518 = vmatprep.mubr.bf16.mxu0 %v65
    %2519 = vmatmul.mubr.bf16.gmra.mrb[0].mxu0 %v64
    %v2520 = vpop.f32.mrb[0].mxu0
    %v2521 = vadd.f32 %v2480, %v2520
    %v2522 = vpop.f32.mrb[0].mxu0
    %v2523 = vadd.f32 %v2482, %v2522
    %v2524 = vpop.f32.mrb[0].mxu0
    %v2525 = vpop.f32.mrb[0].mxu0
    %2526 = vdwg.mxu0
    %2527 = vmatprep.subr.bf16.mxu0 %v1925
    %2528 = vmatpush1.bf16.msra.mxu0 %v1924
    %2529 = vmatprep.subr.bf16.mxu0 %v1931
    %2530 = vmatpush1.bf16.msra.mxu0 %v1930
    %2531 = vmatprep.subr.bf16.mxu0 %v1937
    %2532 = vmatpush1.bf16.msra.mxu0 %v1936
    %2533 = vmatprep.subr.bf16.mxu0 %v1943
    %2534 = vmatpush1.bf16.msra.mxu0 %v1942
    %2535 = vmatprep.subr.bf16.mxu0 %v1949
    %2536 = vmatpush1.bf16.msra.mxu0 %v1948
    %2537 = vmatprep.subr.bf16.mxu0 %v1955
    %2538 = vmatpush1.bf16.msra.mxu0 %v1954
    %2539 = vmatprep.subr.bf16.mxu0 %v1961
    %2540 = vmatpush1.bf16.msra.mxu0 %v1960
    %2541 = vmatprep.subr.bf16.mxu0 %v1967
    %2542 = vmatpush1.bf16.msra.mxu0 %v1966
    %2543 = vmatprep.subr.bf16.mxu0 %v1973
    %2544 = vmatpush1.bf16.msra.mxu0 %v1972
    %2545 = vmatprep.subr.bf16.mxu0 %v1979
    %2546 = vmatpush1.bf16.msra.mxu0 %v1978
    %2547 = vmatprep.subr.bf16.mxu0 %v1985
    %2548 = vmatpush1.bf16.msra.mxu0 %v1984
    %2549 = vmatprep.subr.bf16.mxu0 %v1991
    %2550 = vmatpush1.bf16.msra.mxu0 %v1990
    %2551 = vmatprep.subr.bf16.mxu0 %v1997
    %2552 = vmatpush1.bf16.msra.mxu0 %v1996
    %2553 = vmatprep.subr.bf16.mxu0 %v2003
    %2554 = vmatpush1.bf16.msra.mxu0 %v2002
    %2555 = vmatprep.subr.bf16.mxu0 %v2009
    %2556 = vmatpush1.bf16.msra.mxu0 %v2008
    %2557 = vmatprep.subr.bf16.mxu0 %v2015
    %2558 = vmatpush1.bf16.msra.mxu0 %v2014
    %2559 = vmatprep.mubr.bf16.mxu0 %v67
    %2560 = vmatmul.mubr.bf16.gmra.mrb[0].mxu0 %v66
    %v2561 = vpop.f32.mrb[0].mxu0
    %v2562 = vadd.f32 %v2521, %v2561
    %v2563 = vpop.f32.mrb[0].mxu0
    %v2564 = vadd.f32 %v2523, %v2563
    %v2565 = vpop.f32.mrb[0].mxu0
    %v2566 = vpop.f32.mrb[0].mxu0
    %2567 = vdwg.mxu0
    %2568 = vmatprep.subr.bf16.mxu0 %v1639
    %2569 = vmatpush1.bf16.msra.mxu0 %v1638
    %2570 = vmatprep.subr.bf16.mxu0 %v1645
    %2571 = vmatpush1.bf16.msra.mxu0 %v1644
    %2572 = vmatprep.subr.bf16.mxu0 %v1651
    %2573 = vmatpush1.bf16.msra.mxu0 %v1650
    %2574 = vmatprep.subr.bf16.mxu0 %v1657
    %2575 = vmatpush1.bf16.msra.mxu0 %v1656
    %2576 = vmatprep.subr.bf16.mxu0 %v1663
    %2577 = vmatpush1.bf16.msra.mxu0 %v1662
    %2578 = vmatprep.subr.bf16.mxu0 %v1669
    %2579 = vmatpush1.bf16.msra.mxu0 %v1668
    %2580 = vmatprep.subr.bf16.mxu0 %v1675
    %2581 = vmatpush1.bf16.msra.mxu0 %v1674
    %2582 = vmatprep.subr.bf16.mxu0 %v1681
    %2583 = vmatpush1.bf16.msra.mxu0 %v1680
    %2584 = vmatprep.subr.bf16.mxu0 %v1687
    %2585 = vmatpush1.bf16.msra.mxu0 %v1686
    %2586 = vmatprep.subr.bf16.mxu0 %v1693
    %2587 = vmatpush1.bf16.msra.mxu0 %v1692
    %2588 = vmatprep.subr.bf16.mxu0 %v1699
    %2589 = vmatpush1.bf16.msra.mxu0 %v1698
    %2590 = vmatprep.subr.bf16.mxu0 %v1705
    %2591 = vmatpush1.bf16.msra.mxu0 %v1704
    %2592 = vmatprep.subr.bf16.mxu0 %v1711
    %2593 = vmatpush1.bf16.msra.mxu0 %v1710
    %2594 = vmatprep.subr.bf16.mxu0 %v1717
    %2595 = vmatpush1.bf16.msra.mxu0 %v1716
    %2596 = vmatprep.subr.bf16.mxu0 %v1723
    %2597 = vmatpush1.bf16.msra.mxu0 %v1722
    %2598 = vmatprep.subr.bf16.mxu0 %v1729
    %2599 = vmatpush1.bf16.msra.mxu0 %v1728
    %2600 = vmatprep.mubr.bf16.mxu0 %v61
    %2601 = vmatmul.mubr.bf16.gmra.mrb[0].mxu0 %v60
    %v2602 = vpop.f32.mrb[0].mxu0
    %v2603 = vadd.f32 %v465, %v2602
    %v2604 = vpop.f32.mrb[0].mxu0
    %v2605 = vadd.f32 %v469, %v2604
    %v2606 = vpop.f32.mrb[0].mxu0
    %v2607 = vpop.f32.mrb[0].mxu0
    %2608 = vdwg.mxu0
    %2609 = vmatprep.subr.bf16.mxu0 %v1735
    %2610 = vmatpush1.bf16.msra.mxu0 %v1734
    %2611 = vmatprep.subr.bf16.mxu0 %v1741
    %2612 = vmatpush1.bf16.msra.mxu0 %v1740
    %2613 = vmatprep.subr.bf16.mxu0 %v1747
    %2614 = vmatpush1.bf16.msra.mxu0 %v1746
    %2615 = vmatprep.subr.bf16.mxu0 %v1753
    %2616 = vmatpush1.bf16.msra.mxu0 %v1752
    %2617 = vmatprep.subr.bf16.mxu0 %v1759
    %2618 = vmatpush1.bf16.msra.mxu0 %v1758
    %2619 = vmatprep.subr.bf16.mxu0 %v1765
    %2620 = vmatpush1.bf16.msra.mxu0 %v1764
    %2621 = vmatprep.subr.bf16.mxu0 %v1771
    %2622 = vmatpush1.bf16.msra.mxu0 %v1770
    %2623 = vmatprep.subr.bf16.mxu0 %v1777
    %2624 = vmatpush1.bf16.msra.mxu0 %v1776
    %2625 = vmatprep.subr.bf16.mxu0 %v1783
    %2626 = vmatpush1.bf16.msra.mxu0 %v1782
    %2627 = vmatprep.subr.bf16.mxu0 %v1789
    %2628 = vmatpush1.bf16.msra.mxu0 %v1788
    %2629 = vmatprep.subr.bf16.mxu0 %v1795
    %2630 = vmatpush1.bf16.msra.mxu0 %v1794
    %2631 = vmatprep.subr.bf16.mxu0 %v1801
    %2632 = vmatpush1.bf16.msra.mxu0 %v1800
    %2633 = vmatprep.subr.bf16.mxu0 %v1807
    %2634 = vmatpush1.bf16.msra.mxu0 %v1806
    %2635 = vmatprep.subr.bf16.mxu0 %v1813
    %2636 = vmatpush1.bf16.msra.mxu0 %v1812
    %2637 = vmatprep.subr.bf16.mxu0 %v1819
    %2638 = vmatpush1.bf16.msra.mxu0 %v1818
    %2639 = vmatprep.subr.bf16.mxu0 %v1825
    %2640 = vmatpush1.bf16.msra.mxu0 %v1824
    %2641 = vmatprep.mubr.bf16.mxu0 %v63
    %2642 = vmatmul.mubr.bf16.gmra.mrb[0].mxu0 %v62
    %v2643 = vpop.f32.mrb[0].mxu0
    %v2644 = vadd.f32 %v2603, %v2643
    %v2645 = vpop.f32.mrb[0].mxu0
    %v2646 = vadd.f32 %v2605, %v2645
    %v2647 = vpop.f32.mrb[0].mxu0
    %v2648 = vpop.f32.mrb[0].mxu0
    %2649 = vdwg.mxu0
    %2650 = vmatprep.subr.bf16.mxu0 %v1831
    %2651 = vmatpush1.bf16.msra.mxu0 %v1830
    %2652 = vmatprep.subr.bf16.mxu0 %v1837
    %2653 = vmatpush1.bf16.msra.mxu0 %v1836
    %2654 = vmatprep.subr.bf16.mxu0 %v1843
    %2655 = vmatpush1.bf16.msra.mxu0 %v1842
    %2656 = vmatprep.subr.bf16.mxu0 %v1849
    %2657 = vmatpush1.bf16.msra.mxu0 %v1848
    %2658 = vmatprep.subr.bf16.mxu0 %v1855
    %2659 = vmatpush1.bf16.msra.mxu0 %v1854
    %2660 = vmatprep.subr.bf16.mxu0 %v1861
    %2661 = vmatpush1.bf16.msra.mxu0 %v1860
    %2662 = vmatprep.subr.bf16.mxu0 %v1867
    %2663 = vmatpush1.bf16.msra.mxu0 %v1866
    %2664 = vmatprep.subr.bf16.mxu0 %v1873
    %2665 = vmatpush1.bf16.msra.mxu0 %v1872
    %2666 = vmatprep.subr.bf16.mxu0 %v1879
    %2667 = vmatpush1.bf16.msra.mxu0 %v1878
    %2668 = vmatprep.subr.bf16.mxu0 %v1885
    %2669 = vmatpush1.bf16.msra.mxu0 %v1884
    %2670 = vmatprep.subr.bf16.mxu0 %v1891
    %2671 = vmatpush1.bf16.msra.mxu0 %v1890
    %2672 = vmatprep.subr.bf16.mxu0 %v1897
    %2673 = vmatpush1.bf16.msra.mxu0 %v1896
    %2674 = vmatprep.subr.bf16.mxu0 %v1903
    %2675 = vmatpush1.bf16.msra.mxu0 %v1902
    %2676 = vmatprep.subr.bf16.mxu0 %v1909
    %2677 = vmatpush1.bf16.msra.mxu0 %v1908
    %2678 = vmatprep.subr.bf16.mxu0 %v1915
    %2679 = vmatpush1.bf16.msra.mxu0 %v1914
    %2680 = vmatprep.subr.bf16.mxu0 %v1921
    %2681 = vmatpush1.bf16.msra.mxu0 %v1920
    %2682 = vmatprep.mubr.bf16.mxu0 %v65
    %2683 = vmatmul.mubr.bf16.gmra.mrb[0].mxu0 %v64
    %v2684 = vpop.f32.mrb[0].mxu0
    %v2685 = vadd.f32 %v2644, %v2684
    %v2686 = vpop.f32.mrb[0].mxu0
    %v2687 = vadd.f32 %v2646, %v2686
    %v2688 = vpop.f32.mrb[0].mxu0
    %v2689 = vpop.f32.mrb[0].mxu0
    %2690 = vdwg.mxu0
    %2691 = vmatprep.subr.bf16.mxu0 %v1927
    %2692 = vmatpush1.bf16.msra.mxu0 %v1926
    %2693 = vmatprep.subr.bf16.mxu0 %v1933
    %2694 = vmatpush1.bf16.msra.mxu0 %v1932
    %2695 = vmatprep.subr.bf16.mxu0 %v1939
    %2696 = vmatpush1.bf16.msra.mxu0 %v1938
    %2697 = vmatprep.subr.bf16.mxu0 %v1945
    %2698 = vmatpush1.bf16.msra.mxu0 %v1944
    %2699 = vmatprep.subr.bf16.mxu0 %v1951
    %2700 = vmatpush1.bf16.msra.mxu0 %v1950
    %2701 = vmatprep.subr.bf16.mxu0 %v1957
    %2702 = vmatpush1.bf16.msra.mxu0 %v1956
    %2703 = vmatprep.subr.bf16.mxu0 %v1963
    %2704 = vmatpush1.bf16.msra.mxu0 %v1962
    %2705 = vmatprep.subr.bf16.mxu0 %v1969
    %2706 = vmatpush1.bf16.msra.mxu0 %v1968
    %2707 = vmatprep.subr.bf16.mxu0 %v1975
    %2708 = vmatpush1.bf16.msra.mxu0 %v1974
    %2709 = vmatprep.subr.bf16.mxu0 %v1981
    %2710 = vmatpush1.bf16.msra.mxu0 %v1980
    %2711 = vmatprep.subr.bf16.mxu0 %v1987
    %2712 = vmatpush1.bf16.msra.mxu0 %v1986
    %2713 = vmatprep.subr.bf16.mxu0 %v1993
    %2714 = vmatpush1.bf16.msra.mxu0 %v1992
    %2715 = vmatprep.subr.bf16.mxu0 %v1999
    %2716 = vmatpush1.bf16.msra.mxu0 %v1998
    %2717 = vmatprep.subr.bf16.mxu0 %v2005
    %2718 = vmatpush1.bf16.msra.mxu0 %v2004
    %2719 = vmatprep.subr.bf16.mxu0 %v2011
    %2720 = vmatpush1.bf16.msra.mxu0 %v2010
    %2721 = vmatprep.subr.bf16.mxu0 %v2017
    %2722 = vmatpush1.bf16.msra.mxu0 %v2016
    %2723 = vmatprep.mubr.bf16.mxu0 %v67
    %2724 = vmatmul.mubr.bf16.gmra.mrb[0].mxu0 %v66
    %v2725 = vpop.f32.mrb[0].mxu0
    %v2726 = vadd.f32 %v2685, %v2725
    %v2727 = vpop.f32.mrb[0].mxu0
    %v2728 = vadd.f32 %v2687, %v2727
    %v2729 = vpop.f32.mrb[0].mxu0
    %v2730 = vpop.f32.mrb[0].mxu0
    %2731 = vdwg.mxu0
    %2732 = vmatprep.subr.bf16.mxu0 %v1641
    %2733 = vmatpush1.bf16.msra.mxu0 %v1640
    %2734 = vmatprep.subr.bf16.mxu0 %v1647
    %2735 = vmatpush1.bf16.msra.mxu0 %v1646
    %2736 = vmatprep.subr.bf16.mxu0 %v1653
    %2737 = vmatpush1.bf16.msra.mxu0 %v1652
    %2738 = vmatprep.subr.bf16.mxu0 %v1659
    %2739 = vmatpush1.bf16.msra.mxu0 %v1658
    %2740 = vmatprep.subr.bf16.mxu0 %v1665
    %2741 = vmatpush1.bf16.msra.mxu0 %v1664
    %2742 = vmatprep.subr.bf16.mxu0 %v1671
    %2743 = vmatpush1.bf16.msra.mxu0 %v1670
    %2744 = vmatprep.subr.bf16.mxu0 %v1677
    %2745 = vmatpush1.bf16.msra.mxu0 %v1676
    %2746 = vmatprep.subr.bf16.mxu0 %v1683
    %2747 = vmatpush1.bf16.msra.mxu0 %v1682
    %2748 = vmatprep.subr.bf16.mxu0 %v1689
    %2749 = vmatpush1.bf16.msra.mxu0 %v1688
    %2750 = vmatprep.subr.bf16.mxu0 %v1695
    %2751 = vmatpush1.bf16.msra.mxu0 %v1694
    %2752 = vmatprep.subr.bf16.mxu0 %v1701
    %2753 = vmatpush1.bf16.msra.mxu0 %v1700
    %2754 = vmatprep.subr.bf16.mxu0 %v1707
    %2755 = vmatpush1.bf16.msra.mxu0 %v1706
    %2756 = vmatprep.subr.bf16.mxu0 %v1713
    %2757 = vmatpush1.bf16.msra.mxu0 %v1712
    %2758 = vmatprep.subr.bf16.mxu0 %v1719
    %2759 = vmatpush1.bf16.msra.mxu0 %v1718
    %2760 = vmatprep.subr.bf16.mxu0 %v1725
    %2761 = vmatpush1.bf16.msra.mxu0 %v1724
    %2762 = vmatprep.subr.bf16.mxu0 %v1731
    %2763 = vmatpush1.bf16.msra.mxu0 %v1730
    %2764 = vmatprep.mubr.bf16.mxu0 %v61
    %2765 = vmatmul.mubr.bf16.gmra.mrb[0].mxu0 %v60
    %v2766 = vpop.f32.mrb[0].mxu0
    %v2767 = vadd.f32 %v473, %v2766
    %v2768 = vpop.f32.mrb[0].mxu0
    %v2769 = vadd.f32 %v477, %v2768
    %v2770 = vpop.f32.mrb[0].mxu0
    %v2771 = vpop.f32.mrb[0].mxu0
    %2772 = vdwg.mxu0
    %2773 = vmatprep.subr.bf16.mxu0 %v1737
    %2774 = vmatpush1.bf16.msra.mxu0 %v1736
    %2775 = vmatprep.subr.bf16.mxu0 %v1743
    %2776 = vmatpush1.bf16.msra.mxu0 %v1742
    %2777 = vmatprep.subr.bf16.mxu0 %v1749
    %2778 = vmatpush1.bf16.msra.mxu0 %v1748
    %2779 = vmatprep.subr.bf16.mxu0 %v1755
    %2780 = vmatpush1.bf16.msra.mxu0 %v1754
    %2781 = vmatprep.subr.bf16.mxu0 %v1761
    %2782 = vmatpush1.bf16.msra.mxu0 %v1760
    %2783 = vmatprep.subr.bf16.mxu0 %v1767
    %2784 = vmatpush1.bf16.msra.mxu0 %v1766
    %2785 = vmatprep.subr.bf16.mxu0 %v1773
    %2786 = vmatpush1.bf16.msra.mxu0 %v1772
    %2787 = vmatprep.subr.bf16.mxu0 %v1779
    %2788 = vmatpush1.bf16.msra.mxu0 %v1778
    %2789 = vmatprep.subr.bf16.mxu0 %v1785
    %2790 = vmatpush1.bf16.msra.mxu0 %v1784
    %2791 = vmatprep.subr.bf16.mxu0 %v1791
    %2792 = vmatpush1.bf16.msra.mxu0 %v1790
    %2793 = vmatprep.subr.bf16.mxu0 %v1797
    %2794 = vmatpush1.bf16.msra.mxu0 %v1796
    %2795 = vmatprep.subr.bf16.mxu0 %v1803
    %2796 = vmatpush1.bf16.msra.mxu0 %v1802
    %2797 = vmatprep.subr.bf16.mxu0 %v1809
    %2798 = vmatpush1.bf16.msra.mxu0 %v1808
    %2799 = vmatprep.subr.bf16.mxu0 %v1815
    %2800 = vmatpush1.bf16.msra.mxu0 %v1814
    %2801 = vmatprep.subr.bf16.mxu0 %v1821
    %2802 = vmatpush1.bf16.msra.mxu0 %v1820
    %2803 = vmatprep.subr.bf16.mxu0 %v1827
    %2804 = vmatpush1.bf16.msra.mxu0 %v1826
    %2805 = vmatprep.mubr.bf16.mxu0 %v63
    %2806 = vmatmul.mubr.bf16.gmra.mrb[0].mxu0 %v62
    %v2807 = vpop.f32.mrb[0].mxu0
    %v2808 = vadd.f32 %v2767, %v2807
    %v2809 = vpop.f32.mrb[0].mxu0
    %v2810 = vadd.f32 %v2769, %v2809
    %v2811 = vpop.f32.mrb[0].mxu0
    %v2812 = vpop.f32.mrb[0].mxu0
    %2813 = vdwg.mxu0
    %2814 = vmatprep.subr.bf16.mxu0 %v1833
    %2815 = vmatpush1.bf16.msra.mxu0 %v1832
    %2816 = vmatprep.subr.bf16.mxu0 %v1839
    %2817 = vmatpush1.bf16.msra.mxu0 %v1838
    %2818 = vmatprep.subr.bf16.mxu0 %v1845
    %2819 = vmatpush1.bf16.msra.mxu0 %v1844
    %2820 = vmatprep.subr.bf16.mxu0 %v1851
    %2821 = vmatpush1.bf16.msra.mxu0 %v1850
    %2822 = vmatprep.subr.bf16.mxu0 %v1857
    %2823 = vmatpush1.bf16.msra.mxu0 %v1856
    %2824 = vmatprep.subr.bf16.mxu0 %v1863
    %2825 = vmatpush1.bf16.msra.mxu0 %v1862
    %2826 = vmatprep.subr.bf16.mxu0 %v1869
    %2827 = vmatpush1.bf16.msra.mxu0 %v1868
    %2828 = vmatprep.subr.bf16.mxu0 %v1875
    %2829 = vmatpush1.bf16.msra.mxu0 %v1874
    %2830 = vmatprep.subr.bf16.mxu0 %v1881
    %2831 = vmatpush1.bf16.msra.mxu0 %v1880
    %2832 = vmatprep.subr.bf16.mxu0 %v1887
    %2833 = vmatpush1.bf16.msra.mxu0 %v1886
    %2834 = vmatprep.subr.bf16.mxu0 %v1893
    %2835 = vmatpush1.bf16.msra.mxu0 %v1892
    %2836 = vmatprep.subr.bf16.mxu0 %v1899
    %2837 = vmatpush1.bf16.msra.mxu0 %v1898
    %2838 = vmatprep.subr.bf16.mxu0 %v1905
    %2839 = vmatpush1.bf16.msra.mxu0 %v1904
    %2840 = vmatprep.subr.bf16.mxu0 %v1911
    %2841 = vmatpush1.bf16.msra.mxu0 %v1910
    %2842 = vmatprep.subr.bf16.mxu0 %v1917
    %2843 = vmatpush1.bf16.msra.mxu0 %v1916
    %2844 = vmatprep.subr.bf16.mxu0 %v1923
    %2845 = vmatpush1.bf16.msra.mxu0 %v1922
    %2846 = vmatprep.mubr.bf16.mxu0 %v65
    %2847 = vmatmul.mubr.bf16.gmra.mrb[0].mxu0 %v64
    %v2848 = vpop.f32.mrb[0].mxu0
    %v2849 = vadd.f32 %v2808, %v2848
    %v2850 = vpop.f32.mrb[0].mxu0
    %v2851 = vadd.f32 %v2810, %v2850
    %v2852 = vpop.f32.mrb[0].mxu0
    %v2853 = vpop.f32.mrb[0].mxu0
    %2854 = vdwg.mxu0
    %2855 = vmatprep.subr.bf16.mxu0 %v1929
    %2856 = vmatpush1.bf16.msra.mxu0 %v1928
    %2857 = vmatprep.subr.bf16.mxu0 %v1935
    %2858 = vmatpush1.bf16.msra.mxu0 %v1934
    %2859 = vmatprep.subr.bf16.mxu0 %v1941
    %2860 = vmatpush1.bf16.msra.mxu0 %v1940
    %2861 = vmatprep.subr.bf16.mxu0 %v1947
    %2862 = vmatpush1.bf16.msra.mxu0 %v1946
    %2863 = vmatprep.subr.bf16.mxu0 %v1953
    %2864 = vmatpush1.bf16.msra.mxu0 %v1952
    %2865 = vmatprep.subr.bf16.mxu0 %v1959
    %2866 = vmatpush1.bf16.msra.mxu0 %v1958
    %2867 = vmatprep.subr.bf16.mxu0 %v1965
    %2868 = vmatpush1.bf16.msra.mxu0 %v1964
    %2869 = vmatprep.subr.bf16.mxu0 %v1971
    %2870 = vmatpush1.bf16.msra.mxu0 %v1970
    %2871 = vmatprep.subr.bf16.mxu0 %v1977
    %2872 = vmatpush1.bf16.msra.mxu0 %v1976
    %2873 = vmatprep.subr.bf16.mxu0 %v1983
    %2874 = vmatpush1.bf16.msra.mxu0 %v1982
    %2875 = vmatprep.subr.bf16.mxu0 %v1989
    %2876 = vmatpush1.bf16.msra.mxu0 %v1988
    %2877 = vmatprep.subr.bf16.mxu0 %v1995
    %2878 = vmatpush1.bf16.msra.mxu0 %v1994
    %2879 = vmatprep.subr.bf16.mxu0 %v2001
    %2880 = vmatpush1.bf16.msra.mxu0 %v2000
    %2881 = vmatprep.subr.bf16.mxu0 %v2007
    %2882 = vmatpush1.bf16.msra.mxu0 %v2006
    %2883 = vmatprep.subr.bf16.mxu0 %v2013
    %2884 = vmatpush1.bf16.msra.mxu0 %v2012
    %2885 = vmatprep.subr.bf16.mxu0 %v2019
    %2886 = vmatpush1.bf16.msra.mxu0 %v2018
    %2887 = vmatprep.mubr.bf16.mxu0 %v67
    %2888 = vmatmul.mubr.bf16.gmra.mrb[0].mxu0 %v66
    %v2889 = vpop.f32.mrb[0].mxu0
    %v2890 = vadd.f32 %v2849, %v2889
    %v2891 = vpop.f32.mrb[0].mxu0
    %v2892 = vadd.f32 %v2851, %v2891
    %v2893 = vpop.f32.mrb[0].mxu0
    %v2894 = vpop.f32.mrb[0].mxu0
    %2895 = vdwg.mxu0
    %v2896 = vtanh.pop %v2562
    %v2897 = vtanh.pop %v2564
    %v2898 = vtanh.pop %v2726
    %v2899 = vtanh.pop %v2728
    %v2900 = vtanh.pop %v2890
    %v2901 = vtanh.pop %v2892
    %2902 = vst [vmem:[#allocation8] sm:$0xff] %v2896
    %2903 = vst [vmem:[#allocation8 + $0x8] sm:$0xff] %v2897
    %2904 = vst [vmem:[#allocation8 + $0x10] sm:$0xff] %v2898
    %2905 = vst [vmem:[#allocation8 + $0x18] sm:$0xff] %v2899
    %2906 = vst [vmem:[#allocation8 + $0x20] sm:$0xff] %v2900
    %2907 = vst [vmem:[#allocation8 + $0x28] sm:$0xff] %v2901
    // Predicated region
    $region26: #{tpu_custom_call.1} parent=1 // pred_check
      _
    $region27: #{tpu_custom_call.1} parent=1 // pred_check_branch
      %2909 = sbr.rel (0) target = $region29
    $region28: #{tpu_custom_call.1} parent=1 // pred_region
      %s2911 = ssub.s32 768, 768
      %2912 = vsyncadd [#allocation4], %s2911
      %s2914 = sshll.u32 [#allocation8], 4
      %s2915 = int_to_ptr.vmem [resolvable:$true] %s2914
      %2917 = dma.vmem_to_hbm [thread:$0]  %s2915, 768, %s3, [#allocation4]
    $region29: #{tpu_custom_call.1} parent=1 // pred_fallthru
      _
    // Predicated region
    $region30: #{tpu_custom_call.1} parent=1 // pred_check
      _
    $region31: #{tpu_custom_call.1} parent=1 // pred_check_branch
      %2919 = sbr.rel (0) target = $region33
    $region32: #{tpu_custom_call.1} parent=1 // pred_region
      %2920 = dma.done [#allocation4], 768
    $region33: #{tpu_custom_call.1} parent=1 // pred_fallthru
      _
    %2921 = vsyncpa [#allocation3], 1
    %2922 = vsyncpa [#allocation6], 1
    %2923 = vsyncpa [#allocation4], 1

</llo_original>
